<compile_context>
chip_gen: v7x
topology: tpu7x:2x2x1
jax: 0.10.0
libtpu: 0.0.40
codegen_flags: <defaults>
</compile_context>

<pallas_src>
import numpy as np
import jax
import jax.numpy as jnp
from jax.experimental import pallas as pl
from jax.experimental.pallas import tpu as pltpu


def _round_up(n, m):
    return ((n + m - 1) // m) * m


# ---------------------------------------------------------------------------
# Pallas kernel: TB sequences (batch items) per grid step.
# ---------------------------------------------------------------------------
def _psa_kernel(lens_ref,        # (TB, 1)  int32  valid length per sequence
                data_ref,        # (TB, Lp, X) bf16 zero-padded sequence data
                eh_ref,          # (TB, H)  f32    extra @ W1y + b1 (host-hoisted)
                w1x_ref,         # (X, H)   bf16   data half of W1
                w2_ref,          # (H, H)   bf16
                b2_ref,          # (1, H)   f32
                w3_ref,          # (1, H)   f32
                o_ref):          # (TB, X)  f32
    tb, lp, x = data_ref.shape
    hd = w2_ref.shape[0]
    rows = tb * lp

    # ---- attention MLP over all TB*Lp tokens at once (fills MXU rows) ------
    d_bf = data_ref[...]                                          # (tb, lp, x) bf16
    h = jnp.dot(d_bf.reshape(rows, x), w1x_ref[...],
                preferred_element_type=jnp.float32)               # (rows, H) f32
    # extra/b1 contribution, broadcast over each sequence's Lp tokens.
    h = h.reshape(tb, lp, hd) + eh_ref[...][:, None, :]
    h = jnp.maximum(h, 0.0).reshape(rows, hd)

    h = jnp.dot(h.astype(jnp.bfloat16), w2_ref[...],
                preferred_element_type=jnp.float32)
    h = jnp.maximum(h + b2_ref[...], 0.0)                         # (rows, H) f32

    # Linear(512 -> 1) as a lane reduction (avoids a 1-lane-wide MXU tile).
    # The final bias b3 is dropped: the per-sequence softmax is shift-invariant.
    logits = jnp.sum(h * w3_ref[...], axis=-1, keepdims=True)     # (rows, 1)
    logits = logits.reshape(tb, lp, 1)

    # ---- length-masked softmax over each sequence's tokens -----------------
    lens = lens_ref[...][:, :, None]                              # (tb, 1, 1) i32
    pos = jax.lax.broadcasted_iota(jnp.int32, (tb, lp, 1), 1)
    valid = pos < lens                                            # (tb, lp, 1)
    logits = jnp.where(valid, logits, jnp.float32(-1e30))
    m = jnp.max(logits, axis=1, keepdims=True)                    # (tb, 1, 1)
    p = jnp.where(valid, jnp.exp(logits - m), 0.0)
    denom = jnp.sum(p, axis=1, keepdims=True)
    denom = jnp.maximum(denom, jnp.float32(1e-30))                # guard len==0 padding
    w = p * pl.reciprocal(denom, approx=True)                     # (tb, lp, 1)

    # ---- attention-weighted sum of the original data -----------------------
    # Re-read data_ref here so the tile is not held live across both matmuls.
    d = data_ref[...].astype(jnp.float32)                         # (tb, lp, x)
    o_ref[...] = jnp.sum(w * d, axis=1)                           # (tb, x)


def packed_sequence_attention(data_bf, eh, lens, params, tb):
    """data_bf: (Bp, Lp, X) bf16, eh: (Bp, H) f32, lens: (Bp, 1) i32."""
    bp, lp, x = data_bf.shape
    hd = params["w2"].shape[0]
    n_blocks = bp // tb

    grid_spec = pltpu.PrefetchScalarGridSpec(
        num_scalar_prefetch=0,
        grid=(n_blocks,),
        in_specs=[
            pl.BlockSpec((tb, 1), lambda b: (b, 0)),          # lengths
            pl.BlockSpec((tb, lp, x), lambda b: (b, 0, 0)),   # data (bf16)
            pl.BlockSpec((tb, hd), lambda b: (b, 0)),         # extra@W1y + b1
            pl.BlockSpec((x, hd), lambda b: (0, 0)),          # W1 data half (bf16)
            pl.BlockSpec((hd, hd), lambda b: (0, 0)),         # W2 (bf16)
            pl.BlockSpec((1, hd), lambda b: (0, 0)),          # b2
            pl.BlockSpec((1, hd), lambda b: (0, 0)),          # w3 row
        ],
        out_specs=pl.BlockSpec((tb, x), lambda b: (b, 0)),
    )

    return pl.pallas_call(
        _psa_kernel,
        out_shape=jax.ShapeDtypeStruct((bp, x), jnp.float32),
        grid_spec=grid_spec,
        compiler_params=pltpu.CompilerParams(
            dimension_semantics=("parallel",),        # batch blocks shardable on v7x
            vmem_limit_bytes=32 * 1024 * 1024,        # plenty; fits all generations
        ),
    )(lens, data_bf, eh,
      params["w1x"], params["w2"], params["b2"], params["w3"])


# ---------------------------------------------------------------------------
# Module wrapper (parameter init mirrors torch.nn.Linear defaults).
# ---------------------------------------------------------------------------
class PackedSequenceAttentionPallas:
    HIDDEN = 512
    TB_TARGET = 32          # sequences per grid step -> TB*Lp MXU rows

    def __init__(self, x, y, key):
        self.x, self.y = x, y
        H = self.HIDDEN

        def linear(kw, kb, fan_in, fan_out):
            bound = 1.0 / np.sqrt(fan_in)
            w = jax.random.uniform(kw, (fan_in, fan_out), jnp.float32, -bound, bound)
            b = jax.random.uniform(kb, (fan_out,), jnp.float32, -bound, bound)
            return w, b

        k1, k2, k3, k4, k5, k6 = jax.random.split(key, 6)
        w1, b1 = linear(k1, k2, x + y, H)
        w2, b2 = linear(k3, k4, H, H)
        w3, b3 = linear(k5, k6, H, 1)

        # W1 split: data half ships bf16 to the kernel; the extra half (and b1)
        # stay on the host -- extra @ W1y + b1 is one tiny XLA matmul per call.
        self.w1y = w1[x:]                    # (Y, H) f32
        self.b1 = b1                         # (H,)   f32
        self.params = dict(
            w1x=w1[:x].astype(jnp.bfloat16), # (X, H)
            w2=w2.astype(jnp.bfloat16),      # (H, H)
            b2=b2.reshape(1, H),             # f32
            w3=w3.reshape(1, H),             # f32 (b3 dropped: cancels in softmax)
        )
        # f32 copies for the pure-JAX reference.
        self.ref_params = dict(w1=w1, b1=b1, w2=w2, b2=b2, w3=w3, b3=b3)

    def forward(self, data, lengths, extra):
        """data: zero-padded (B, Lmax, X) stand-in for PackedSequencePlus data,
        lengths: per-batch valid lengths, extra: (B, Y).  Returns (B, X)."""
        B, Lmax, X = data.shape
        assert X == self.x
        assert extra.shape == (B, self.y)
        assert len(lengths) == B
        H = self.HIDDEN

        # Tile geometry: Lp multiple of 16 (bf16 sublane packing), TB a multiple
        # of 8; keep >=2 grid steps when the batch allows (v7x two-TC split).
        Lp = _round_up(max(Lmax, 16), 16)
        Bp8 = _round_up(B, 8)
        TB = min(self.TB_TARGET, Bp8)
        if Bp8 // TB < 2 and Bp8 > 8:
            TB = max(8, _round_up(Bp8 // 2, 8))
        Bp = _round_up(B, TB)

        # TODO(synk): PackedSequencePlus sort/pack/select bookkeeping is host
        # glue; the kernel consumes zero-padded dense data, and in production
        # this bf16 padded repack would be done once at data-prep time.
        data_bf = jnp.zeros((Bp, Lp, X), jnp.bfloat16)
        data_bf = data_bf.at[:B, :Lmax, :].set(data.astype(jnp.bfloat16))
        lens = jnp.zeros((Bp, 1), jnp.int32)
        lens = lens.at[:B, 0].set(jnp.asarray(lengths, jnp.int32))

        # Hoisted extra contribution: (B, Y) @ (Y, H) + b1 -> (B, H) f32.
        eh = extra.astype(jnp.float32) @ self.w1y + self.b1
        eh_pad = jnp.zeros((Bp, H), jnp.float32).at[:B].set(eh)

        out = packed_sequence_attention(data_bf, eh_pad, lens, self.params, TB)
        return out[:B]


# ---------------------------------------------------------------------------
# Pure-JAX f32 reference mirroring the PyTorch module (per-sequence loop).
# ---------------------------------------------------------------------------
def reference_forward(data, lengths, extra, p):
    outs = []
    for b in range(data.shape[0]):
        L = int(lengths[b])
        d = data[b, :L]                                        # (L, X)
        e = jnp.broadcast_to(extra[b][None, :], (L, extra.shape[1]))
        c = jnp.concatenate([d, e], axis=1)                    # cat([data, extra], 1)
        h = jax.nn.relu(c @ p["w1"] + p["b1"])
        h = jax.nn.relu(h @ p["w2"] + p["b2"])
        logits = (h @ p["w3"])[:, 0] + p["b3"][0]
        w = jax.nn.softmax(logits, axis=0)[:, None]
        outs.append(jnp.sum(w * d, axis=0))
    return jnp.stack(outs, axis=0)


# ---------------------------------------------------------------------------
# Demo
# ---------------------------------------------------------------------------
if __name__ == "__main__":
    key = jax.random.PRNGKey(0)
    k_data, k_extra, k_params = jax.random.split(key, 3)

    B, Lmax, X, Y = 2, 8, 32, 16
    lengths = [6, 5]

    data = jax.random.normal(k_data, (B, Lmax, X), jnp.float32)
    # Packed-sequence semantics: tokens beyond each length do not exist.
    mask = (jnp.arange(Lmax)[None, :] < jnp.asarray(lengths)[:, None])[..., None]
    data = jnp.where(mask, data, 0.0)
    extra = jax.random.normal(k_extra, (B, Y), jnp.float32)

    module = PackedSequenceAttentionPallas(X, Y, key=k_params)
    out = module.forward(data, lengths, extra)
    jax.block_until_ready(out)
    assert out.shape == (B, X)

    ref = reference_forward(data, lengths, extra, module.ref_params)
    err = float(jnp.max(jnp.abs(out - ref)))
    # bf16 MXU operands + bf16 data vs f32 reference -> loose tolerance.
    assert np.isfinite(err) and err < 5e-2, f"max abs err {err}"
    print("KERNEL_OK")
</pallas_src>

<mosaic_0001>
module attributes {stable_mosaic.version = 11 : i64} {
  func.func @_psa_kernel(%arg0: i32, %arg1: memref<8x1xi32, #tpu.memory_space<vmem>>, %arg2: memref<8x16x32xbf16, #tpu.memory_space<vmem>>, %arg3: memref<8x512xf32, #tpu.memory_space<vmem>>, %arg4: memref<32x512xbf16, #tpu.memory_space<vmem>>, %arg5: memref<512x512xbf16, #tpu.memory_space<vmem>>, %arg6: memref<1x512xf32, #tpu.memory_space<vmem>>, %arg7: memref<1x512xf32, #tpu.memory_space<vmem>>, %arg8: memref<8x32xf32, #tpu.memory_space<vmem>>) attributes {dimension_semantics = [#tpu.dimension_semantics<parallel>], iteration_bounds = array<i64: 1>, scalar_prefetch = 0 : i64, scratch_operands = 0 : i64, tpu.core_type = #tpu.core_type<tc>, window_params = [{transform_indices = @transform_0, window_bounds = array<i64: 8, 1>}, {transform_indices = @transform_1, window_bounds = array<i64: 8, 16, 32>}, {transform_indices = @transform_2, window_bounds = array<i64: 8, 512>}, {pipeline_mode = #tpu.pipeline_mode<synchronous>, transform_indices = @transform_3, window_bounds = array<i64: 32, 512>}, {pipeline_mode = #tpu.pipeline_mode<synchronous>, transform_indices = @transform_4, window_bounds = array<i64: 512, 512>}, {pipeline_mode = #tpu.pipeline_mode<synchronous>, transform_indices = @transform_5, window_bounds = array<i64: 1, 512>}, {pipeline_mode = #tpu.pipeline_mode<synchronous>, transform_indices = @transform_6, window_bounds = array<i64: 1, 512>}, {transform_indices = @transform_7, window_bounds = array<i64: 8, 32>}]} {
    %c0 = arith.constant 0 : index
    %c0_0 = arith.constant 0 : index
    %c0_1 = arith.constant 0 : index
    %0 = vector.load %arg2[%c0, %c0_0, %c0_1] : memref<8x16x32xbf16, #tpu.memory_space<vmem>>, vector<8x16x32xbf16>
    %1 = vector.shape_cast %0 : vector<8x16x32xbf16> to vector<128x32xbf16>
    %c0_2 = arith.constant 0 : index
    %c0_3 = arith.constant 0 : index
    %2 = vector.load %arg4[%c0_2, %c0_3] : memref<32x512xbf16, #tpu.memory_space<vmem>>, vector<32x512xbf16>
    %cst = arith.constant dense<0.000000e+00> : vector<128x512xf32>
    %3 = tpu.matmul %1, %2, %cst {dimension_numbers = #tpu.dot_dimension_numbers<[1], [0], [0], [1], [0, 0, 1, 1], [], []>} : vector<128x32xbf16>, vector<32x512xbf16>, vector<128x512xf32> -> vector<128x512xf32>
    %4 = vector.shape_cast %3 : vector<128x512xf32> to vector<8x16x512xf32>
    %c0_4 = arith.constant 0 : index
    %c0_5 = arith.constant 0 : index
    %5 = vector.load %arg3[%c0_4, %c0_5] : memref<8x512xf32, #tpu.memory_space<vmem>>, vector<8x512xf32>
    %6 = vector.shape_cast %5 : vector<8x512xf32> to vector<8x1x512xf32>
    %7 = vector.broadcast %6 : vector<8x1x512xf32> to vector<8x16x512xf32>
    %8 = arith.addf %4, %7 : vector<8x16x512xf32>
    %cst_6 = arith.constant 0.000000e+00 : f32
    %9 = vector.broadcast %cst_6 : f32 to vector<8x16x512xf32>
    %10 = arith.maximumf %8, %9 : vector<8x16x512xf32>
    %11 = vector.shape_cast %10 : vector<8x16x512xf32> to vector<128x512xf32>
    %12 = arith.truncf %11 : vector<128x512xf32> to vector<128x512xbf16>
    %c0_7 = arith.constant 0 : index
    %c0_8 = arith.constant 0 : index
    %13 = vector.load %arg5[%c0_7, %c0_8] : memref<512x512xbf16, #tpu.memory_space<vmem>>, vector<512x512xbf16>
    %cst_9 = arith.constant dense<0.000000e+00> : vector<128x512xf32>
    %14 = tpu.matmul %12, %13, %cst_9 {dimension_numbers = #tpu.dot_dimension_numbers<[1], [0], [0], [1], [0, 0, 1, 1], [], []>} : vector<128x512xbf16>, vector<512x512xbf16>, vector<128x512xf32> -> vector<128x512xf32>
    %c0_10 = arith.constant 0 : index
    %c0_11 = arith.constant 0 : index
    %15 = vector.load %arg6[%c0_10, %c0_11] : memref<1x512xf32, #tpu.memory_space<vmem>>, vector<1x512xf32>
    %16 = vector.broadcast %15 : vector<1x512xf32> to vector<128x512xf32>
    %17 = arith.addf %14, %16 : vector<128x512xf32>
    %cst_12 = arith.constant 0.000000e+00 : f32
    %18 = vector.broadcast %cst_12 : f32 to vector<128x512xf32>
    %19 = arith.maximumf %17, %18 : vector<128x512xf32>
    %c0_13 = arith.constant 0 : index
    %c0_14 = arith.constant 0 : index
    %20 = vector.load %arg7[%c0_13, %c0_14] : memref<1x512xf32, #tpu.memory_space<vmem>>, vector<1x512xf32>
    %21 = vector.broadcast %20 : vector<1x512xf32> to vector<128x512xf32>
    %22 = arith.mulf %19, %21 : vector<128x512xf32>
    %cst_15 = arith.constant dense<0.000000e+00> : vector<128xf32>
    %23 = vector.multi_reduction <add>, %22, %cst_15 [1] : vector<128x512xf32> to vector<128xf32>
    %24 = vector.shape_cast %23 : vector<128xf32> to vector<128x1xf32>
    %25 = vector.shape_cast %24 : vector<128x1xf32> to vector<8x16x1xf32>
    %c0_16 = arith.constant 0 : index
    %c0_17 = arith.constant 0 : index
    %26 = vector.load %arg1[%c0_16, %c0_17] : memref<8x1xi32, #tpu.memory_space<vmem>>, vector<8x1xi32>
    %27 = vector.shape_cast %26 : vector<8x1xi32> to vector<8x1x1xi32>
    %28 = tpu.iota {dimensions = array<i32: 1>} : vector<8x16x1xi32>
    %29 = vector.broadcast %27 : vector<8x1x1xi32> to vector<8x16x1xi32>
    %30 = arith.cmpi slt, %28, %29 : vector<8x16x1xi32>
    %cst_18 = arith.constant -1.000000e+30 : f32
    %31 = vector.broadcast %cst_18 : f32 to vector<8x16x1xf32>
    %32 = arith.select %30, %25, %31 : vector<8x16x1xi1>, vector<8x16x1xf32>
    %cst_19 = arith.constant dense<0xFF800000> : vector<8x1xf32>
    %33 = vector.multi_reduction <maximumf>, %32, %cst_19 [1] : vector<8x16x1xf32> to vector<8x1xf32>
    %34 = vector.shape_cast %33 : vector<8x1xf32> to vector<8x1x1xf32>
    %35 = vector.broadcast %34 : vector<8x1x1xf32> to vector<8x16x1xf32>
    %36 = arith.subf %32, %35 : vector<8x16x1xf32>
    %37 = math.exp %36 : vector<8x16x1xf32>
    %cst_20 = arith.constant 0.000000e+00 : f32
    %38 = vector.broadcast %cst_20 : f32 to vector<8x16x1xf32>
    %39 = arith.select %30, %37, %38 : vector<8x16x1xi1>, vector<8x16x1xf32>
    %cst_21 = arith.constant dense<0.000000e+00> : vector<8x1xf32>
    %40 = vector.multi_reduction <add>, %39, %cst_21 [1] : vector<8x16x1xf32> to vector<8x1xf32>
    %41 = vector.shape_cast %40 : vector<8x1xf32> to vector<8x1x1xf32>
    %cst_22 = arith.constant 1.000000e-30 : f32
    %42 = vector.broadcast %cst_22 : f32 to vector<8x1x1xf32>
    %43 = arith.maximumf %41, %42 : vector<8x1x1xf32>
    %44 = tpu.reciprocal %43 {approx = true} : vector<8x1x1xf32> -> vector<8x1x1xf32>
    %45 = vector.broadcast %44 : vector<8x1x1xf32> to vector<8x16x1xf32>
    %46 = arith.mulf %39, %45 : vector<8x16x1xf32>
    %c0_23 = arith.constant 0 : index
    %c0_24 = arith.constant 0 : index
    %c0_25 = arith.constant 0 : index
    %47 = vector.load %arg2[%c0_23, %c0_24, %c0_25] : memref<8x16x32xbf16, #tpu.memory_space<vmem>>, vector<8x16x32xbf16>
    %48 = arith.extf %47 : vector<8x16x32xbf16> to vector<8x16x32xf32>
    %49 = vector.broadcast %46 : vector<8x16x1xf32> to vector<8x16x32xf32>
    %50 = arith.mulf %49, %48 : vector<8x16x32xf32>
    %cst_26 = arith.constant dense<0.000000e+00> : vector<8x32xf32>
    %51 = vector.multi_reduction <add>, %50, %cst_26 [1] : vector<8x16x32xf32> to vector<8x32xf32>
    %c0_27 = arith.constant 0 : index
    %c0_28 = arith.constant 0 : index
    %52 = vector.load %arg8[%c0_27, %c0_28] : memref<8x32xf32, #tpu.memory_space<vmem>>, vector<8x32xf32>
    tpu.vector_store %arg8[%c0_27, %c0_28], %51 {strides = array<i32>} : memref<8x32xf32, #tpu.memory_space<vmem>>, vector<8x32xf32>,
    return
  }
  func.func @transform_0(%arg0: i32) -> (i32, i32) {
    %c0_i32 = arith.constant 0 : i32
    %c0_i32_0 = arith.constant 0 : i32
    return %arg0, %c0_i32 : i32, i32
  }
  func.func @transform_1(%arg0: i32) -> (i32, i32, i32) {
    %c0_i32 = arith.constant 0 : i32
    %c0_i32_0 = arith.constant 0 : i32
    %c0_i32_1 = arith.constant 0 : i32
    return %arg0, %c0_i32, %c0_i32_0 : i32, i32, i32
  }
  func.func @transform_2(%arg0: i32) -> (i32, i32) {
    %c0_i32 = arith.constant 0 : i32
    %c0_i32_0 = arith.constant 0 : i32
    return %arg0, %c0_i32 : i32, i32
  }
  func.func @transform_3(%arg0: i32) -> (i32, i32) {
    %c0_i32 = arith.constant 0 : i32
    %c0_i32_0 = arith.constant 0 : i32
    %c0_i32_1 = arith.constant 0 : i32
    return %c0_i32, %c0_i32_0 : i32, i32
  }
  func.func @transform_4(%arg0: i32) -> (i32, i32) {
    %c0_i32 = arith.constant 0 : i32
    %c0_i32_0 = arith.constant 0 : i32
    %c0_i32_1 = arith.constant 0 : i32
    return %c0_i32, %c0_i32_0 : i32, i32
  }
  func.func @transform_5(%arg0: i32) -> (i32, i32) {
    %c0_i32 = arith.constant 0 : i32
    %c0_i32_0 = arith.constant 0 : i32
    %c0_i32_1 = arith.constant 0 : i32
    return %c0_i32, %c0_i32_0 : i32, i32
  }
  func.func @transform_6(%arg0: i32) -> (i32, i32) {
    %c0_i32 = arith.constant 0 : i32
    %c0_i32_0 = arith.constant 0 : i32
    %c0_i32_1 = arith.constant 0 : i32
    return %c0_i32, %c0_i32_0 : i32, i32
  }
  func.func @transform_7(%arg0: i32) -> (i32, i32) {
    %c0_i32 = arith.constant 0 : i32
    %c0_i32_0 = arith.constant 0 : i32
    return %arg0, %c0_i32 : i32, i32
  }
}

</mosaic_0001>

<llo_original>
// kernel: tpu_custom_call.1
$region0: #{tpu_custom_call.1}
  #allocation0 [shape = 'u32[]', space=smem, size = 0x4, offset = 0x4, fixed_abs, tag = 'smem constant byte address 0x4 - core index']
  #allocation1 [shape = 'u32[144,128]{1,0:T(1,128)}', space=vmem, size = 0x12000, scoped, tag = 'internal scratch']
  %s0 = inlined_call_operand.vmem [shape: s32[8,1], index: 0, kind: input, shape index: {}]
  %s1 = inlined_call_operand.hbm [shape: bf16[8,16,32], index: 1, kind: input, shape index: {}]
  %s2 = inlined_call_operand.hbm [shape: f32[8,512], index: 2, kind: input, shape index: {}]
  %s3 = inlined_call_operand.hbm [shape: bf16[32,512], index: 3, kind: input, shape index: {}]
  %s4 = inlined_call_operand.hbm [shape: bf16[512,512], index: 4, kind: input, shape index: {}]
  %s5 = inlined_call_operand.vmem [shape: f32[1,512], index: 5, kind: input, shape index: {}]
  %s6 = inlined_call_operand.vmem [shape: f32[1,512], index: 6, kind: input, shape index: {}]
  %s7 = inlined_call_operand.hbm [shape: f32[8,32], index: 7, kind: output, shape index: {}]
  %s8 = sld [smem:[#allocation0]]
  $region54: #{tpu_custom_call.1} parent=0
    _
  %s10 = ssub.s32 1, %s8
  %s11 = scalar_select 0, %s10, %s8
  $region1: #{tpu_custom_call.1} parent=0
    #allocation2 [shape = 'u8[32768]{0}', space=vmem, size = 0x8000, scoped, tag = 'input window, operand 1, single buffered']
    #allocation3 [shape = 's32[1]{0}', space=sflag, size = 0x4, scoped, tag = 'scoped memory for tpu_custom_call.1']
    #allocation4 [shape = 's32[1]{0}', space=sflag, size = 0x4, scoped, tag = 'scoped memory for tpu_custom_call.1']
    #allocation5 [shape = 'u8[16384]{0}', space=vmem, size = 0x4000, scoped, tag = 'input window, operand 2, single buffered']
    #allocation6 [shape = 's32[1]{0}', space=sflag, size = 0x4, scoped, tag = 'scoped memory for tpu_custom_call.1']
    #allocation7 [shape = 'u8[32768]{0}', space=vmem, size = 0x8000, scoped, tag = 'input window, operand 3, single buffered']
    #allocation8 [shape = 'u8[524288]{0}', space=vmem, size = 0x80000, scoped, tag = 'input window, operand 4, single buffered']
    #allocation9 [shape = 's32[1]{0}', space=sflag, size = 0x4, scoped, tag = 'scoped memory for tpu_custom_call.1']
    #allocation10 [shape = 'u8[4096]{0}', space=vmem, size = 0x1000, scoped, tag = 'output window, operand 0, single buffered']
    %12 = vsyncpa [#allocation3], 0
    %13 = vsyncpa [#allocation6], 0
    %14 = vsyncpa [#allocation9], 0
    %15 = vsyncpa [#allocation4], 0
    // Predicated region
    $region2: #{tpu_custom_call.1} parent=1 // pred_check
      _
    $region3: #{tpu_custom_call.1} parent=1 // pred_check_branch
      %17 = sbr.rel (0) target = $region5
    $region4: #{tpu_custom_call.1} parent=1 // pred_region
      _
    $region5: #{tpu_custom_call.1} parent=1 // pred_fallthru
      _
    // Predicated region
    $region6: #{tpu_custom_call.1} parent=1 // pred_check
      _
    $region7: #{tpu_custom_call.1} parent=1 // pred_check_branch
      %19 = sbr.rel (0) target = $region9
    $region8: #{tpu_custom_call.1} parent=1 // pred_region
      %s21 = ssub.s32 1024, 1024
      %22 = vsyncadd [#allocation3], %s21
      %s23 = sshll.u32 [#allocation2], 4
      %s24 = int_to_ptr.vmem [resolvable:$true] %s23
      %29 = dma.hbm_to_vmem [thread:$0]  %s1, 1024, %s24, [#allocation3], 64, 64, 4
    $region9: #{tpu_custom_call.1} parent=1 // pred_fallthru
      _
    // Predicated region
    $region10: #{tpu_custom_call.1} parent=1 // pred_check
      _
    $region11: #{tpu_custom_call.1} parent=1 // pred_check_branch
      %31 = sbr.rel (0) target = $region13
    $region12: #{tpu_custom_call.1} parent=1 // pred_region
      %s33 = ssub.s32 512, 512
      %34 = vsyncadd [#allocation6], %s33
      %s36 = sshll.u32 [#allocation5], 4
      %s37 = int_to_ptr.vmem [resolvable:$true] %s36
      %39 = dma.hbm_to_vmem [thread:$0]  %s2, 512, %s37, [#allocation6]
    $region13: #{tpu_custom_call.1} parent=1 // pred_fallthru
      _
    // Predicated region
    $region14: #{tpu_custom_call.1} parent=1 // pred_check
      _
    $region15: #{tpu_custom_call.1} parent=1 // pred_check_branch
      %41 = sbr.rel (0) target = $region17
    $region16: #{tpu_custom_call.1} parent=1 // pred_region
      %s43 = ssub.s32 1024, 1024
      %44 = vsyncadd [#allocation6], %s43
      %s45 = sshll.u32 [#allocation7], 4
      %s46 = int_to_ptr.vmem [resolvable:$true] %s45
      %51 = dma.hbm_to_vmem [thread:$0]  %s3, 1024, %s46, [#allocation6], 256, 256, 16
    $region17: #{tpu_custom_call.1} parent=1 // pred_fallthru
      _
    // Predicated region
    $region18: #{tpu_custom_call.1} parent=1 // pred_check
      _
    $region19: #{tpu_custom_call.1} parent=1 // pred_check_branch
      %53 = sbr.rel (0) target = $region21
    $region20: #{tpu_custom_call.1} parent=1 // pred_region
      %s55 = ssub.s32 16384, 16384
      %56 = vsyncadd [#allocation9], %s55
      %s57 = sshll.u32 [#allocation8], 4
      %s58 = int_to_ptr.vmem [resolvable:$true] %s57
      %63 = dma.hbm_to_vmem [thread:$0]  %s4, 16384, %s58, [#allocation9], 256, 256, 16
    $region21: #{tpu_custom_call.1} parent=1 // pred_fallthru
      _
    // Predicated region
    $region22: #{tpu_custom_call.1} parent=1 // pred_check
      _
    $region23: #{tpu_custom_call.1} parent=1 // pred_check_branch
      %65 = sbr.rel (0) target = $region25
    $region24: #{tpu_custom_call.1} parent=1 // pred_region
      _
    $region25: #{tpu_custom_call.1} parent=1 // pred_fallthru
      _
    // Predicated region
    $region26: #{tpu_custom_call.1} parent=1 // pred_check
      _
    $region27: #{tpu_custom_call.1} parent=1 // pred_check_branch
      %67 = sbr.rel (0) target = $region29
    $region28: #{tpu_custom_call.1} parent=1 // pred_region
      _
    $region29: #{tpu_custom_call.1} parent=1 // pred_fallthru
      _
    // Predicated region
    $region30: #{tpu_custom_call.1} parent=1 // pred_check
      _
    $region31: #{tpu_custom_call.1} parent=1 // pred_check_branch
      %69 = sbr.rel (0) target = $region33
    $region32: #{tpu_custom_call.1} parent=1 // pred_region
      %70 = dma.done [#allocation3], 1024
    $region33: #{tpu_custom_call.1} parent=1 // pred_fallthru
      _
    // Predicated region
    $region34: #{tpu_custom_call.1} parent=1 // pred_check
      _
    $region35: #{tpu_custom_call.1} parent=1 // pred_check_branch
      %72 = sbr.rel (0) target = $region37
    $region36: #{tpu_custom_call.1} parent=1 // pred_region
      %73 = dma.done [#allocation6], 512
    $region37: #{tpu_custom_call.1} parent=1 // pred_fallthru
      _
    // Predicated region
    $region38: #{tpu_custom_call.1} parent=1 // pred_check
      _
    $region39: #{tpu_custom_call.1} parent=1 // pred_check_branch
      %75 = sbr.rel (0) target = $region41
    $region40: #{tpu_custom_call.1} parent=1 // pred_region
      %76 = dma.done [#allocation6], 1024
    $region41: #{tpu_custom_call.1} parent=1 // pred_fallthru
      _
    // Predicated region
    $region42: #{tpu_custom_call.1} parent=1 // pred_check
      _
    $region43: #{tpu_custom_call.1} parent=1 // pred_check_branch
      %78 = sbr.rel (0) target = $region45
    $region44: #{tpu_custom_call.1} parent=1 // pred_region
      %79 = dma.done [#allocation9], 16384
    $region45: #{tpu_custom_call.1} parent=1 // pred_fallthru
      _
    %v81 = vld [vmem:[#allocation2] sm:$0xf]
    %v82 = vld [vmem:[#allocation2 + $0x4] sm:$0xf]
    %v83 = vld [vmem:[#allocation2 + $0x8] sm:$0xf]
    %v84 = vld [vmem:[#allocation2 + $0xc] sm:$0xf]
    %v85 = vld [vmem:[#allocation2 + $0x10] sm:$0xf]
    %v86 = vld [vmem:[#allocation2 + $0x14] sm:$0xf]
    %v87 = vld [vmem:[#allocation2 + $0x18] sm:$0xf]
    %v88 = vld [vmem:[#allocation2 + $0x1c] sm:$0xf]
    %v89 = vld [vmem:[#allocation2 + $0x20] sm:$0xf]
    %v90 = vld [vmem:[#allocation2 + $0x24] sm:$0xf]
    %v91 = vld [vmem:[#allocation2 + $0x28] sm:$0xf]
    %v92 = vld [vmem:[#allocation2 + $0x2c] sm:$0xf]
    %v93 = vld [vmem:[#allocation2 + $0x30] sm:$0xf]
    %v94 = vld [vmem:[#allocation2 + $0x34] sm:$0xf]
    %v95 = vld [vmem:[#allocation2 + $0x38] sm:$0xf]
    %v96 = vld [vmem:[#allocation2 + $0x3c] sm:$0xf]
    %v97 = vld [vmem:[#allocation7] sm:$0xff]
    %v98 = vld [vmem:[#allocation7 + $0x8] sm:$0xff]
    %v99 = vld [vmem:[#allocation7 + $0x10] sm:$0xff]
    %v100 = vld [vmem:[#allocation7 + $0x18] sm:$0xff]
    %v101 = vld [vmem:[#allocation7 + $0x20] sm:$0xff]
    %v102 = vld [vmem:[#allocation7 + $0x28] sm:$0xff]
    %v103 = vld [vmem:[#allocation7 + $0x30] sm:$0xff]
    %v104 = vld [vmem:[#allocation7 + $0x38] sm:$0xff]
    %v121 = vunpack.c.l.b16 %v81
    %v122 = vunpack.c.l.b16 %v82
    %v123 = vunpack.c.l.b16 %v83
    %v124 = vunpack.c.l.b16 %v84
    %v125 = vunpack.c.l.b16 %v85
    %v126 = vunpack.c.l.b16 %v86
    %v127 = vunpack.c.l.b16 %v87
    %v128 = vunpack.c.l.b16 %v88
    %v129 = vunpack.c.l.b16 %v89
    %v130 = vunpack.c.l.b16 %v90
    %v131 = vunpack.c.l.b16 %v91
    %v132 = vunpack.c.l.b16 %v92
    %v133 = vunpack.c.l.b16 %v93
    %v134 = vunpack.c.l.b16 %v94
    %v135 = vunpack.c.l.b16 %v95
    %v136 = vunpack.c.l.b16 %v96
    %v137 = vpack.c.b16 %v122, %v121
    %v138 = vpack.c.b16 %v124, %v123
    %v139 = vpack.c.b16 %v126, %v125
    %v140 = vpack.c.b16 %v128, %v127
    %v141 = vpack.c.b16 %v130, %v129
    %v142 = vpack.c.b16 %v132, %v131
    %v143 = vpack.c.b16 %v134, %v133
    %v144 = vpack.c.b16 %v136, %v135
    %v153 = vunpack.c.l.b16 %v97
    %v154 = vunpack.c.h.b16 %v97
    %v155 = vunpack.c.l.b16 %v98
    %v156 = vunpack.c.h.b16 %v98
    %v157 = vunpack.c.l.b16 %v99
    %v158 = vunpack.c.h.b16 %v99
    %v159 = vunpack.c.l.b16 %v100
    %v160 = vunpack.c.h.b16 %v100
    %v161 = vunpack.c.l.b16 %v101
    %v162 = vunpack.c.h.b16 %v101
    %v163 = vunpack.c.l.b16 %v102
    %v164 = vunpack.c.h.b16 %v102
    %v165 = vunpack.c.l.b16 %v103
    %v166 = vunpack.c.h.b16 %v103
    %v167 = vunpack.c.l.b16 %v104
    %v168 = vunpack.c.h.b16 %v104
    %v169 = vpack.c.b16 %v157, %v153
    %v170 = vpack.c.b16 %v158, %v154
    %v171 = vpack.c.b16 %v159, %v155
    %v172 = vpack.c.b16 %v160, %v156
    %v173 = vpack.c.b16 %v165, %v161
    %v174 = vpack.c.b16 %v166, %v162
    %v175 = vpack.c.b16 %v167, %v163
    %v176 = vpack.c.b16 %v168, %v164
    %vm185 = vcmask 261120
    %v187 = vsel %vm185, %v137, 0
    %v190 = vsel %vm185, %v138, 0
    %v193 = vsel %vm185, %v139, 0
    %v196 = vsel %vm185, %v140, 0
    %v199 = vsel %vm185, %v141, 0
    %v202 = vsel %vm185, %v142, 0
    %v205 = vsel %vm185, %v143, 0
    %v208 = vsel %vm185, %v144, 0
    %210 = vmatprep.subr.bf16.mxu0 %v170
    %211 = vmatpush1.bf16.msra.mxu0 %v169
    %212 = vmatprep.subr.bf16.mxu0 %v174
    %213 = vmatpush1.bf16.msra.mxu0 %v173
    %214 = vmatprep.subr.bf16.mxu0 0
    %215 = vmatpush1.bf16.msra.mxu0 0
    %216 = vmatprep.subr.bf16.mxu0 0
    %217 = vmatpush1.bf16.msra.mxu0 0
    %218 = vmatprep.subr.bf16.mxu0 0
    %219 = vmatpush1.bf16.msra.mxu0 0
    %220 = vmatprep.subr.bf16.mxu0 0
    %221 = vmatpush1.bf16.msra.mxu0 0
    %222 = vmatprep.subr.bf16.mxu0 0
    %223 = vmatpush1.bf16.msra.mxu0 0
    %224 = vmatprep.subr.bf16.mxu0 0
    %225 = vmatpush1.bf16.msra.mxu0 0
    %226 = vmatprep.subr.bf16.mxu0 0
    %227 = vmatpush1.bf16.msra.mxu0 0
    %228 = vmatprep.subr.bf16.mxu0 0
    %229 = vmatpush1.bf16.msra.mxu0 0
    %230 = vmatprep.subr.bf16.mxu0 0
    %231 = vmatpush1.bf16.msra.mxu0 0
    %232 = vmatprep.subr.bf16.mxu0 0
    %233 = vmatpush1.bf16.msra.mxu0 0
    %234 = vmatprep.subr.bf16.mxu0 0
    %235 = vmatpush1.bf16.msra.mxu0 0
    %236 = vmatprep.subr.bf16.mxu0 0
    %237 = vmatpush1.bf16.msra.mxu0 0
    %238 = vmatprep.subr.bf16.mxu0 0
    %239 = vmatpush1.bf16.msra.mxu0 0
    %240 = vmatprep.subr.bf16.mxu0 0
    %241 = vmatpush1.bf16.msra.mxu0 0
    %242 = vmatprep.mubr.bf16.mxu0 0
    %243 = vmatmul.mubr.bf16.gmra.mrb[0].mxu0 %v187
    %v244 = vpop.f32.mrb[0].mxu0
    %v245 = vadd.f32 0.0, %v244
    %v246 = vpop.f32.mrb[0].mxu0
    %v247 = vadd.f32 0.0, %v246
    %v248 = vpop.f32.mrb[0].mxu0
    %v249 = vadd.f32 0.0, %v248
    %v250 = vpop.f32.mrb[0].mxu0
    %v251 = vadd.f32 0.0, %v250
    %252 = vmatprep.mubr.bf16.mxu0 0
    %253 = vmatmul.mubr.bf16.gmra.mrb[0].mxu0 %v190
    %v254 = vpop.f32.mrb[0].mxu0
    %v255 = vadd.f32 0.0, %v254
    %v256 = vpop.f32.mrb[0].mxu0
    %v257 = vadd.f32 0.0, %v256
    %v258 = vpop.f32.mrb[0].mxu0
    %v259 = vadd.f32 0.0, %v258
    %v260 = vpop.f32.mrb[0].mxu0
    %v261 = vadd.f32 0.0, %v260
    %262 = vmatprep.mubr.bf16.mxu0 0
    %263 = vmatmul.mubr.bf16.gmra.mrb[0].mxu0 %v193
    %v264 = vpop.f32.mrb[0].mxu0
    %v265 = vadd.f32 0.0, %v264
    %v266 = vpop.f32.mrb[0].mxu0
    %v267 = vadd.f32 0.0, %v266
    %v268 = vpop.f32.mrb[0].mxu0
    %v269 = vadd.f32 0.0, %v268
    %v270 = vpop.f32.mrb[0].mxu0
    %v271 = vadd.f32 0.0, %v270
    %272 = vmatprep.mubr.bf16.mxu0 0
    %273 = vmatmul.mubr.bf16.gmra.mrb[0].mxu0 %v196
    %v274 = vpop.f32.mrb[0].mxu0
    %v275 = vadd.f32 0.0, %v274
    %v276 = vpop.f32.mrb[0].mxu0
    %v277 = vadd.f32 0.0, %v276
    %v278 = vpop.f32.mrb[0].mxu0
    %v279 = vadd.f32 0.0, %v278
    %v280 = vpop.f32.mrb[0].mxu0
    %v281 = vadd.f32 0.0, %v280
    %282 = vmatprep.mubr.bf16.mxu0 0
    %283 = vmatmul.mubr.bf16.gmra.mrb[0].mxu0 %v199
    %v284 = vpop.f32.mrb[0].mxu0
    %v285 = vadd.f32 0.0, %v284
    %v286 = vpop.f32.mrb[0].mxu0
    %v287 = vadd.f32 0.0, %v286
    %v288 = vpop.f32.mrb[0].mxu0
    %v289 = vadd.f32 0.0, %v288
    %v290 = vpop.f32.mrb[0].mxu0
    %v291 = vadd.f32 0.0, %v290
    %292 = vmatprep.mubr.bf16.mxu0 0
    %293 = vmatmul.mubr.bf16.gmra.mrb[0].mxu0 %v202
    %v294 = vpop.f32.mrb[0].mxu0
    %v295 = vadd.f32 0.0, %v294
    %v296 = vpop.f32.mrb[0].mxu0
    %v297 = vadd.f32 0.0, %v296
    %v298 = vpop.f32.mrb[0].mxu0
    %v299 = vadd.f32 0.0, %v298
    %v300 = vpop.f32.mrb[0].mxu0
    %v301 = vadd.f32 0.0, %v300
    %302 = vmatprep.mubr.bf16.mxu0 0
    %303 = vmatmul.mubr.bf16.gmra.mrb[0].mxu0 %v205
    %v304 = vpop.f32.mrb[0].mxu0
    %v305 = vadd.f32 0.0, %v304
    %v306 = vpop.f32.mrb[0].mxu0
    %v307 = vadd.f32 0.0, %v306
    %v308 = vpop.f32.mrb[0].mxu0
    %v309 = vadd.f32 0.0, %v308
    %v310 = vpop.f32.mrb[0].mxu0
    %v311 = vadd.f32 0.0, %v310
    %312 = vmatprep.mubr.bf16.mxu0 0
    %313 = vmatmul.mubr.bf16.gmra.mrb[0].mxu0 %v208
    %v314 = vpop.f32.mrb[0].mxu0
    %v315 = vadd.f32 0.0, %v314
    %v316 = vpop.f32.mrb[0].mxu0
    %v317 = vadd.f32 0.0, %v316
    %v318 = vpop.f32.mrb[0].mxu0
    %v319 = vadd.f32 0.0, %v318
    %v320 = vpop.f32.mrb[0].mxu0
    %v321 = vadd.f32 0.0, %v320
    %322 = vdwg.mxu0
    %323 = vmatprep.subr.bf16.mxu0 %v172
    %324 = vmatpush1.bf16.msra.mxu0 %v171
    %325 = vmatprep.subr.bf16.mxu0 %v176
    %326 = vmatpush1.bf16.msra.mxu0 %v175
    %327 = vmatprep.subr.bf16.mxu0 0
    %328 = vmatpush1.bf16.msra.mxu0 0
    %329 = vmatprep.subr.bf16.mxu0 0
    %330 = vmatpush1.bf16.msra.mxu0 0
    %331 = vmatprep.subr.bf16.mxu0 0
    %332 = vmatpush1.bf16.msra.mxu0 0
    %333 = vmatprep.subr.bf16.mxu0 0
    %334 = vmatpush1.bf16.msra.mxu0 0
    %335 = vmatprep.subr.bf16.mxu0 0
    %336 = vmatpush1.bf16.msra.mxu0 0
    %337 = vmatprep.subr.bf16.mxu0 0
    %338 = vmatpush1.bf16.msra.mxu0 0
    %339 = vmatprep.subr.bf16.mxu0 0
    %340 = vmatpush1.bf16.msra.mxu0 0
    %341 = vmatprep.subr.bf16.mxu0 0
    %342 = vmatpush1.bf16.msra.mxu0 0
    %343 = vmatprep.subr.bf16.mxu0 0
    %344 = vmatpush1.bf16.msra.mxu0 0
    %345 = vmatprep.subr.bf16.mxu0 0
    %346 = vmatpush1.bf16.msra.mxu0 0
    %347 = vmatprep.subr.bf16.mxu0 0
    %348 = vmatpush1.bf16.msra.mxu0 0
    %349 = vmatprep.subr.bf16.mxu0 0
    %350 = vmatpush1.bf16.msra.mxu0 0
    %351 = vmatprep.subr.bf16.mxu0 0
    %352 = vmatpush1.bf16.msra.mxu0 0
    %353 = vmatprep.subr.bf16.mxu0 0
    %354 = vmatpush1.bf16.msra.mxu0 0
    %355 = vmatprep.mubr.bf16.mxu0 0
    %356 = vmatmul.mubr.bf16.gmra.mrb[0].mxu0 %v187
    %v357 = vpop.f32.mrb[0].mxu0
    %v358 = vadd.f32 0.0, %v357
    %v359 = vpop.f32.mrb[0].mxu0
    %v360 = vadd.f32 0.0, %v359
    %v361 = vpop.f32.mrb[0].mxu0
    %v362 = vadd.f32 0.0, %v361
    %v363 = vpop.f32.mrb[0].mxu0
    %v364 = vadd.f32 0.0, %v363
    %365 = vmatprep.mubr.bf16.mxu0 0
    %366 = vmatmul.mubr.bf16.gmra.mrb[0].mxu0 %v190
    %v367 = vpop.f32.mrb[0].mxu0
    %v368 = vadd.f32 0.0, %v367
    %v369 = vpop.f32.mrb[0].mxu0
    %v370 = vadd.f32 0.0, %v369
    %v371 = vpop.f32.mrb[0].mxu0
    %v372 = vadd.f32 0.0, %v371
    %v373 = vpop.f32.mrb[0].mxu0
    %v374 = vadd.f32 0.0, %v373
    %375 = vmatprep.mubr.bf16.mxu0 0
    %376 = vmatmul.mubr.bf16.gmra.mrb[0].mxu0 %v193
    %v377 = vpop.f32.mrb[0].mxu0
    %v378 = vadd.f32 0.0, %v377
    %v379 = vpop.f32.mrb[0].mxu0
    %v380 = vadd.f32 0.0, %v379
    %v381 = vpop.f32.mrb[0].mxu0
    %v382 = vadd.f32 0.0, %v381
    %v383 = vpop.f32.mrb[0].mxu0
    %v384 = vadd.f32 0.0, %v383
    %385 = vmatprep.mubr.bf16.mxu0 0
    %386 = vmatmul.mubr.bf16.gmra.mrb[0].mxu0 %v196
    %v387 = vpop.f32.mrb[0].mxu0
    %v388 = vadd.f32 0.0, %v387
    %v389 = vpop.f32.mrb[0].mxu0
    %v390 = vadd.f32 0.0, %v389
    %v391 = vpop.f32.mrb[0].mxu0
    %v392 = vadd.f32 0.0, %v391
    %v393 = vpop.f32.mrb[0].mxu0
    %v394 = vadd.f32 0.0, %v393
    %395 = vmatprep.mubr.bf16.mxu0 0
    %396 = vmatmul.mubr.bf16.gmra.mrb[0].mxu0 %v199
    %v397 = vpop.f32.mrb[0].mxu0
    %v398 = vadd.f32 0.0, %v397
    %v399 = vpop.f32.mrb[0].mxu0
    %v400 = vadd.f32 0.0, %v399
    %v401 = vpop.f32.mrb[0].mxu0
    %v402 = vadd.f32 0.0, %v401
    %v403 = vpop.f32.mrb[0].mxu0
    %v404 = vadd.f32 0.0, %v403
    %405 = vmatprep.mubr.bf16.mxu0 0
    %406 = vmatmul.mubr.bf16.gmra.mrb[0].mxu0 %v202
    %v407 = vpop.f32.mrb[0].mxu0
    %v408 = vadd.f32 0.0, %v407
    %v409 = vpop.f32.mrb[0].mxu0
    %v410 = vadd.f32 0.0, %v409
    %v411 = vpop.f32.mrb[0].mxu0
    %v412 = vadd.f32 0.0, %v411
    %v413 = vpop.f32.mrb[0].mxu0
    %v414 = vadd.f32 0.0, %v413
    %415 = vmatprep.mubr.bf16.mxu0 0
    %416 = vmatmul.mubr.bf16.gmra.mrb[0].mxu0 %v205
    %v417 = vpop.f32.mrb[0].mxu0
    %v418 = vadd.f32 0.0, %v417
    %v419 = vpop.f32.mrb[0].mxu0
    %v420 = vadd.f32 0.0, %v419
    %v421 = vpop.f32.mrb[0].mxu0
    %v422 = vadd.f32 0.0, %v421
    %v423 = vpop.f32.mrb[0].mxu0
    %v424 = vadd.f32 0.0, %v423
    %425 = vmatprep.mubr.bf16.mxu0 0
    %426 = vmatmul.mubr.bf16.gmra.mrb[0].mxu0 %v208
    %v427 = vpop.f32.mrb[0].mxu0
    %v428 = vadd.f32 0.0, %v427
    %v429 = vpop.f32.mrb[0].mxu0
    %v430 = vadd.f32 0.0, %v429
    %v431 = vpop.f32.mrb[0].mxu0
    %v432 = vadd.f32 0.0, %v431
    %v433 = vpop.f32.mrb[0].mxu0
    %v434 = vadd.f32 0.0, %v433
    %435 = vdwg.mxu0
    %v436 = vld [vmem:[#allocation5] sm:$0xff]
    %v437 = vld [vmem:[#allocation5 + $0x8] sm:$0xff]
    %v438 = vld [vmem:[#allocation5 + $0x10] sm:$0xff]
    %v439 = vld [vmem:[#allocation5 + $0x18] sm:$0xff]
    %v444 = vcombine.low %v436, %v437
    %v445 = vcombine.high %v436, %v437
    %v446 = vcombine.low %v438, %v439
    %v447 = vcombine.high %v438, %v439
    %v449 = vunpack.c.l.s4 1966171168
    %v450 = vunpack.c.0.s8 %v449
    %v451 = vlaneseq
    %v452 = vshrl.u32 %v451, 7
    %v453 = vsub.s32 %v450, %v452
    %v454 = vrot.slane %v444, %v453
    %v456 = vunpack.c.l.s4 1966171168
    %v457 = vunpack.c.0.s8 %v456
    %v458 = vlaneseq
    %v459 = vshrl.u32 %v458, 7
    %v460 = vsub.s32 %v457, %v459
    %v461 = vrot.slane %v445, %v460
    %v463 = vunpack.c.l.s4 1966171168
    %v464 = vunpack.c.0.s8 %v463
    %v465 = vlaneseq
    %v466 = vshrl.u32 %v465, 7
    %v467 = vsub.s32 %v464, %v466
    %v468 = vrot.slane %v446, %v467
    %v470 = vunpack.c.l.s4 1966171168
    %v471 = vunpack.c.0.s8 %v470
    %v472 = vlaneseq
    %v473 = vshrl.u32 %v472, 7
    %v474 = vsub.s32 %v471, %v473
    %v475 = vrot.slane %v447, %v474
    %v476 = vcombine.low %v454, %v468
    %v477 = vcombine.high %v454, %v468
    %v478 = vcombine.low %v461, %v475
    %v479 = vcombine.high %v461, %v475
    %v481 = vunpack.c.l.s4 1966171168
    %v482 = vunpack.c.0.s8 %v481
    %v483 = vlaneseq
    %v484 = vshrl.u32 %v483, 7
    %v485 = vsub.s32 %v482, %v484
    %v486 = vrot.slane %v476, %v485
    %v488 = vunpack.c.l.s4 1966171168
    %v489 = vunpack.c.0.s8 %v488
    %v490 = vlaneseq
    %v491 = vshrl.u32 %v490, 7
    %v492 = vsub.s32 %v489, %v491
    %v493 = vrot.slane %v478, %v492
    %v495 = vunpack.c.l.s4 1966171168
    %v496 = vunpack.c.0.s8 %v495
    %v497 = vlaneseq
    %v498 = vshrl.u32 %v497, 7
    %v499 = vsub.s32 %v496, %v498
    %v500 = vrot.slane %v477, %v499
    %v502 = vunpack.c.l.s4 1966171168
    %v503 = vunpack.c.0.s8 %v502
    %v504 = vlaneseq
    %v505 = vshrl.u32 %v504, 7
    %v506 = vsub.s32 %v503, %v505
    %v507 = vrot.slane %v479, %v506
    %v508 = vcombine.high %v486, %v486
    %v509 = vcombine.high %v493, %v493
    %v510 = vcombine.high %v500, %v500
    %v511 = vcombine.high %v507, %v507
    %v512 = vlaneseq
    %v513 = vshrl.u32 %v512, 7
    %v514 = vsub.s32 0, %v513
    %v515 = vrot.slane %v486, %v514
    %v516 = vlaneseq
    %v517 = vshrl.u32 %v516, 7
    %v518 = vsub.s32 1, %v517
    %v519 = vrot.slane %v486, %v518
    %v520 = vlaneseq
    %v521 = vshrl.u32 %v520, 7
    %v522 = vsub.s32 2, %v521
    %v523 = vrot.slane %v486, %v522
    %v524 = vlaneseq
    %v525 = vshrl.u32 %v524, 7
    %v526 = vsub.s32 3, %v525
    %v527 = vrot.slane %v486, %v526
    %v528 = vlaneseq
    %v529 = vshrl.u32 %v528, 7
    %v530 = vsub.s32 0, %v529
    %v531 = vrot.slane %v500, %v530
    %v532 = vlaneseq
    %v533 = vshrl.u32 %v532, 7
    %v534 = vsub.s32 1, %v533
    %v535 = vrot.slane %v500, %v534
    %v536 = vlaneseq
    %v537 = vshrl.u32 %v536, 7
    %v538 = vsub.s32 2, %v537
    %v539 = vrot.slane %v500, %v538
    %v540 = vlaneseq
    %v541 = vshrl.u32 %v540, 7
    %v542 = vsub.s32 3, %v541
    %v543 = vrot.slane %v500, %v542
    %v544 = vlaneseq
    %v545 = vshrl.u32 %v544, 7
    %v546 = vsub.s32 0, %v545
    %v547 = vrot.slane %v508, %v546
    %v548 = vlaneseq
    %v549 = vshrl.u32 %v548, 7
    %v550 = vsub.s32 1, %v549
    %v551 = vrot.slane %v508, %v550
    %v552 = vlaneseq
    %v553 = vshrl.u32 %v552, 7
    %v554 = vsub.s32 2, %v553
    %v555 = vrot.slane %v508, %v554
    %v556 = vlaneseq
    %v557 = vshrl.u32 %v556, 7
    %v558 = vsub.s32 3, %v557
    %v559 = vrot.slane %v508, %v558
    %v560 = vlaneseq
    %v561 = vshrl.u32 %v560, 7
    %v562 = vsub.s32 0, %v561
    %v563 = vrot.slane %v510, %v562
    %v564 = vlaneseq
    %v565 = vshrl.u32 %v564, 7
    %v566 = vsub.s32 1, %v565
    %v567 = vrot.slane %v510, %v566
    %v568 = vlaneseq
    %v569 = vshrl.u32 %v568, 7
    %v570 = vsub.s32 2, %v569
    %v571 = vrot.slane %v510, %v570
    %v572 = vlaneseq
    %v573 = vshrl.u32 %v572, 7
    %v574 = vsub.s32 3, %v573
    %v575 = vrot.slane %v510, %v574
    %v576 = vlaneseq
    %v577 = vshrl.u32 %v576, 7
    %v578 = vsub.s32 0, %v577
    %v579 = vrot.slane %v493, %v578
    %v580 = vlaneseq
    %v581 = vshrl.u32 %v580, 7
    %v582 = vsub.s32 1, %v581
    %v583 = vrot.slane %v493, %v582
    %v584 = vlaneseq
    %v585 = vshrl.u32 %v584, 7
    %v586 = vsub.s32 2, %v585
    %v587 = vrot.slane %v493, %v586
    %v588 = vlaneseq
    %v589 = vshrl.u32 %v588, 7
    %v590 = vsub.s32 3, %v589
    %v591 = vrot.slane %v493, %v590
    %v592 = vlaneseq
    %v593 = vshrl.u32 %v592, 7
    %v594 = vsub.s32 0, %v593
    %v595 = vrot.slane %v507, %v594
    %v596 = vlaneseq
    %v597 = vshrl.u32 %v596, 7
    %v598 = vsub.s32 1, %v597
    %v599 = vrot.slane %v507, %v598
    %v600 = vlaneseq
    %v601 = vshrl.u32 %v600, 7
    %v602 = vsub.s32 2, %v601
    %v603 = vrot.slane %v507, %v602
    %v604 = vlaneseq
    %v605 = vshrl.u32 %v604, 7
    %v606 = vsub.s32 3, %v605
    %v607 = vrot.slane %v507, %v606
    %v608 = vlaneseq
    %v609 = vshrl.u32 %v608, 7
    %v610 = vsub.s32 0, %v609
    %v611 = vrot.slane %v509, %v610
    %v612 = vlaneseq
    %v613 = vshrl.u32 %v612, 7
    %v614 = vsub.s32 1, %v613
    %v615 = vrot.slane %v509, %v614
    %v616 = vlaneseq
    %v617 = vshrl.u32 %v616, 7
    %v618 = vsub.s32 2, %v617
    %v619 = vrot.slane %v509, %v618
    %v620 = vlaneseq
    %v621 = vshrl.u32 %v620, 7
    %v622 = vsub.s32 3, %v621
    %v623 = vrot.slane %v509, %v622
    %v624 = vlaneseq
    %v625 = vshrl.u32 %v624, 7
    %v626 = vsub.s32 0, %v625
    %v627 = vrot.slane %v511, %v626
    %v628 = vlaneseq
    %v629 = vshrl.u32 %v628, 7
    %v630 = vsub.s32 1, %v629
    %v631 = vrot.slane %v511, %v630
    %v632 = vlaneseq
    %v633 = vshrl.u32 %v632, 7
    %v634 = vsub.s32 2, %v633
    %v635 = vrot.slane %v511, %v634
    %v636 = vlaneseq
    %v637 = vshrl.u32 %v636, 7
    %v638 = vsub.s32 3, %v637
    %v639 = vrot.slane %v511, %v638
    %v672 = vadd.f32 %v245, %v515
    %v673 = vadd.f32 %v247, %v519
    %v674 = vadd.f32 %v358, %v523
    %v675 = vadd.f32 %v360, %v527
    %v676 = vadd.f32 %v249, %v515
    %v677 = vadd.f32 %v251, %v519
    %v678 = vadd.f32 %v362, %v523
    %v679 = vadd.f32 %v364, %v527
    %v680 = vadd.f32 %v255, %v531
    %v681 = vadd.f32 %v257, %v535
    %v682 = vadd.f32 %v368, %v539
    %v683 = vadd.f32 %v370, %v543
    %v684 = vadd.f32 %v259, %v531
    %v685 = vadd.f32 %v261, %v535
    %v686 = vadd.f32 %v372, %v539
    %v687 = vadd.f32 %v374, %v543
    %v688 = vadd.f32 %v265, %v547
    %v689 = vadd.f32 %v267, %v551
    %v690 = vadd.f32 %v378, %v555
    %v691 = vadd.f32 %v380, %v559
    %v692 = vadd.f32 %v269, %v547
    %v693 = vadd.f32 %v271, %v551
    %v694 = vadd.f32 %v382, %v555
    %v695 = vadd.f32 %v384, %v559
    %v696 = vadd.f32 %v275, %v563
    %v697 = vadd.f32 %v277, %v567
    %v698 = vadd.f32 %v388, %v571
    %v699 = vadd.f32 %v390, %v575
    %v700 = vadd.f32 %v279, %v563
    %v701 = vadd.f32 %v281, %v567
    %v702 = vadd.f32 %v392, %v571
    %v703 = vadd.f32 %v394, %v575
    %v704 = vadd.f32 %v285, %v579
    %v705 = vadd.f32 %v287, %v583
    %v706 = vadd.f32 %v398, %v587
    %v707 = vadd.f32 %v400, %v591
    %v708 = vadd.f32 %v289, %v579
    %v709 = vadd.f32 %v291, %v583
    %v710 = vadd.f32 %v402, %v587
    %v711 = vadd.f32 %v404, %v591
    %v712 = vadd.f32 %v295, %v595
    %v713 = vadd.f32 %v297, %v599
    %v714 = vadd.f32 %v408, %v603
    %v715 = vadd.f32 %v410, %v607
    %v716 = vadd.f32 %v299, %v595
    %v717 = vadd.f32 %v301, %v599
    %v718 = vadd.f32 %v412, %v603
    %v719 = vadd.f32 %v414, %v607
    %v720 = vadd.f32 %v305, %v611
    %v721 = vadd.f32 %v307, %v615
    %v722 = vadd.f32 %v418, %v619
    %v723 = vadd.f32 %v420, %v623
    %v724 = vadd.f32 %v309, %v611
    %v725 = vadd.f32 %v311, %v615
    %v726 = vadd.f32 %v422, %v619
    %v727 = vadd.f32 %v424, %v623
    %v728 = vadd.f32 %v315, %v627
    %v729 = vadd.f32 %v317, %v631
    %v730 = vadd.f32 %v428, %v635
    %v731 = vadd.f32 %v430, %v639
    %v732 = vadd.f32 %v319, %v627
    %v733 = vadd.f32 %v321, %v631
    %v734 = vadd.f32 %v432, %v635
    %v735 = vadd.f32 %v434, %v639
    %v736 = vmax.f32 %v672, 0.0
    %v737 = vmax.f32 %v673, 0.0
    %v738 = vmax.f32 %v674, 0.0
    %v739 = vmax.f32 %v675, 0.0
    %v740 = vmax.f32 %v676, 0.0
    %v741 = vmax.f32 %v677, 0.0
    %v742 = vmax.f32 %v678, 0.0
    %v743 = vmax.f32 %v679, 0.0
    %v744 = vmax.f32 %v680, 0.0
    %v745 = vmax.f32 %v681, 0.0
    %v746 = vmax.f32 %v682, 0.0
    %v747 = vmax.f32 %v683, 0.0
    %v748 = vmax.f32 %v684, 0.0
    %v749 = vmax.f32 %v685, 0.0
    %v750 = vmax.f32 %v686, 0.0
    %v751 = vmax.f32 %v687, 0.0
    %v752 = vmax.f32 %v688, 0.0
    %v753 = vmax.f32 %v689, 0.0
    %v754 = vmax.f32 %v690, 0.0
    %v755 = vmax.f32 %v691, 0.0
    %v756 = vmax.f32 %v692, 0.0
    %v757 = vmax.f32 %v693, 0.0
    %v758 = vmax.f32 %v694, 0.0
    %v759 = vmax.f32 %v695, 0.0
    %v760 = vmax.f32 %v696, 0.0
    %v761 = vmax.f32 %v697, 0.0
    %v762 = vmax.f32 %v698, 0.0
    %v763 = vmax.f32 %v699, 0.0
    %v764 = vmax.f32 %v700, 0.0
    %v765 = vmax.f32 %v701, 0.0
    %v766 = vmax.f32 %v702, 0.0
    %v767 = vmax.f32 %v703, 0.0
    %v768 = vmax.f32 %v704, 0.0
    %v769 = vmax.f32 %v705, 0.0
    %v770 = vmax.f32 %v706, 0.0
    %v771 = vmax.f32 %v707, 0.0
    %v772 = vmax.f32 %v708, 0.0
    %v773 = vmax.f32 %v709, 0.0
    %v774 = vmax.f32 %v710, 0.0
    %v775 = vmax.f32 %v711, 0.0
    %v776 = vmax.f32 %v712, 0.0
    %v777 = vmax.f32 %v713, 0.0
    %v778 = vmax.f32 %v714, 0.0
    %v779 = vmax.f32 %v715, 0.0
    %v780 = vmax.f32 %v716, 0.0
    %v781 = vmax.f32 %v717, 0.0
    %v782 = vmax.f32 %v718, 0.0
    %v783 = vmax.f32 %v719, 0.0
    %v784 = vmax.f32 %v720, 0.0
    %v785 = vmax.f32 %v721, 0.0
    %v786 = vmax.f32 %v722, 0.0
    %v787 = vmax.f32 %v723, 0.0
    %v788 = vmax.f32 %v724, 0.0
    %v789 = vmax.f32 %v725, 0.0
    %v790 = vmax.f32 %v726, 0.0
    %v791 = vmax.f32 %v727, 0.0
    %v792 = vmax.f32 %v728, 0.0
    %v793 = vmax.f32 %v729, 0.0
    %v794 = vmax.f32 %v730, 0.0
    %v795 = vmax.f32 %v731, 0.0
    %v796 = vmax.f32 %v732, 0.0
    %v797 = vmax.f32 %v733, 0.0
    %v798 = vmax.f32 %v734, 0.0
    %v799 = vmax.f32 %v735, 0.0
    %v800 = vpack.c.bf16 %v740, %v736
    %v801 = vpack.c.bf16 %v741, %v737
    %v802 = vpack.c.bf16 %v742, %v738
    %v803 = vpack.c.bf16 %v743, %v739
    %v804 = vpack.c.bf16 %v748, %v744
    %v805 = vpack.c.bf16 %v749, %v745
    %v806 = vpack.c.bf16 %v750, %v746
    %v807 = vpack.c.bf16 %v751, %v747
    %v808 = vpack.c.bf16 %v756, %v752
    %v809 = vpack.c.bf16 %v757, %v753
    %v810 = vpack.c.bf16 %v758, %v754
    %v811 = vpack.c.bf16 %v759, %v755
    %v812 = vpack.c.bf16 %v764, %v760
    %v813 = vpack.c.bf16 %v765, %v761
    %v814 = vpack.c.bf16 %v766, %v762
    %v815 = vpack.c.bf16 %v767, %v763
    %v816 = vpack.c.bf16 %v772, %v768
    %v817 = vpack.c.bf16 %v773, %v769
    %v818 = vpack.c.bf16 %v774, %v770
    %v819 = vpack.c.bf16 %v775, %v771
    %v820 = vpack.c.bf16 %v780, %v776
    %v821 = vpack.c.bf16 %v781, %v777
    %v822 = vpack.c.bf16 %v782, %v778
    %v823 = vpack.c.bf16 %v783, %v779
    %v824 = vpack.c.bf16 %v788, %v784
    %v825 = vpack.c.bf16 %v789, %v785
    %v826 = vpack.c.bf16 %v790, %v786
    %v827 = vpack.c.bf16 %v791, %v787
    %v828 = vpack.c.bf16 %v796, %v792
    %v829 = vpack.c.bf16 %v797, %v793
    %v830 = vpack.c.bf16 %v798, %v794
    %v831 = vpack.c.bf16 %v799, %v795
    %v832 = vld [vmem:[#allocation8] sm:$0xff]
    %v833 = vld [vmem:[#allocation8 + $0x8] sm:$0xff]
    %v834 = vld [vmem:[#allocation8 + $0x10] sm:$0xff]
    %v835 = vld [vmem:[#allocation8 + $0x18] sm:$0xff]
    %v836 = vld [vmem:[#allocation8 + $0x20] sm:$0xff]
    %v837 = vld [vmem:[#allocation8 + $0x28] sm:$0xff]
    %v838 = vld [vmem:[#allocation8 + $0x30] sm:$0xff]
    %v839 = vld [vmem:[#allocation8 + $0x38] sm:$0xff]
    %v840 = vld [vmem:[#allocation8 + $0x40] sm:$0xff]
    %v841 = vld [vmem:[#allocation8 + $0x48] sm:$0xff]
    %v842 = vld [vmem:[#allocation8 + $0x50] sm:$0xff]
    %v843 = vld [vmem:[#allocation8 + $0x58] sm:$0xff]
    %v844 = vld [vmem:[#allocation8 + $0x60] sm:$0xff]
    %v845 = vld [vmem:[#allocation8 + $0x68] sm:$0xff]
    %v846 = vld [vmem:[#allocation8 + $0x70] sm:$0xff]
    %v847 = vld [vmem:[#allocation8 + $0x78] sm:$0xff]
    %v848 = vld [vmem:[#allocation8 + $0x80] sm:$0xff]
    %v849 = vld [vmem:[#allocation8 + $0x88] sm:$0xff]
    %v850 = vld [vmem:[#allocation8 + $0x90] sm:$0xff]
    %v851 = vld [vmem:[#allocation8 + $0x98] sm:$0xff]
    %v852 = vld [vmem:[#allocation8 + $0xa0] sm:$0xff]
    %v853 = vld [vmem:[#allocation8 + $0xa8] sm:$0xff]
    %v854 = vld [vmem:[#allocation8 + $0xb0] sm:$0xff]
    %v855 = vld [vmem:[#allocation8 + $0xb8] sm:$0xff]
    %v856 = vld [vmem:[#allocation8 + $0xc0] sm:$0xff]
    %v857 = vld [vmem:[#allocation8 + $0xc8] sm:$0xff]
    %v858 = vld [vmem:[#allocation8 + $0xd0] sm:$0xff]
    %v859 = vld [vmem:[#allocation8 + $0xd8] sm:$0xff]
    %v860 = vld [vmem:[#allocation8 + $0xe0] sm:$0xff]
    %v861 = vld [vmem:[#allocation8 + $0xe8] sm:$0xff]
    %v862 = vld [vmem:[#allocation8 + $0xf0] sm:$0xff]
    %v863 = vld [vmem:[#allocation8 + $0xf8] sm:$0xff]
    %v864 = vld [vmem:[#allocation8 + $0x100] sm:$0xff]
    %v865 = vld [vmem:[#allocation8 + $0x108] sm:$0xff]
    %v866 = vld [vmem:[#allocation8 + $0x110] sm:$0xff]
    %v867 = vld [vmem:[#allocation8 + $0x118] sm:$0xff]
    %v868 = vld [vmem:[#allocation8 + $0x120] sm:$0xff]
    %v869 = vld [vmem:[#allocation8 + $0x128] sm:$0xff]
    %v870 = vld [vmem:[#allocation8 + $0x130] sm:$0xff]
    %v871 = vld [vmem:[#allocation8 + $0x138] sm:$0xff]
    %v872 = vld [vmem:[#allocation8 + $0x140] sm:$0xff]
    %v873 = vld [vmem:[#allocation8 + $0x148] sm:$0xff]
    %v874 = vld [vmem:[#allocation8 + $0x150] sm:$0xff]
    %v875 = vld [vmem:[#allocation8 + $0x158] sm:$0xff]
    %v876 = vld [vmem:[#allocation8 + $0x160] sm:$0xff]
    %v877 = vld [vmem:[#allocation8 + $0x168] sm:$0xff]
    %v878 = vld [vmem:[#allocation8 + $0x170] sm:$0xff]
    %v879 = vld [vmem:[#allocation8 + $0x178] sm:$0xff]
    %v880 = vld [vmem:[#allocation8 + $0x180] sm:$0xff]
    %v881 = vld [vmem:[#allocation8 + $0x188] sm:$0xff]
    %v882 = vld [vmem:[#allocation8 + $0x190] sm:$0xff]
    %v883 = vld [vmem:[#allocation8 + $0x198] sm:$0xff]
    %v884 = vld [vmem:[#allocation8 + $0x1a0] sm:$0xff]
    %v885 = vld [vmem:[#allocation8 + $0x1a8] sm:$0xff]
    %v886 = vld [vmem:[#allocation8 + $0x1b0] sm:$0xff]
    %v887 = vld [vmem:[#allocation8 + $0x1b8] sm:$0xff]
    %v888 = vld [vmem:[#allocation8 + $0x1c0] sm:$0xff]
    %v889 = vld [vmem:[#allocation8 + $0x1c8] sm:$0xff]
    %v890 = vld [vmem:[#allocation8 + $0x1d0] sm:$0xff]
    %v891 = vld [vmem:[#allocation8 + $0x1d8] sm:$0xff]
    %v892 = vld [vmem:[#allocation8 + $0x1e0] sm:$0xff]
    %v893 = vld [vmem:[#allocation8 + $0x1e8] sm:$0xff]
    %v894 = vld [vmem:[#allocation8 + $0x1f0] sm:$0xff]
    %v895 = vld [vmem:[#allocation8 + $0x1f8] sm:$0xff]
    %v896 = vld [vmem:[#allocation8 + $0x200] sm:$0xff]
    %v897 = vld [vmem:[#allocation8 + $0x208] sm:$0xff]
    %v898 = vld [vmem:[#allocation8 + $0x210] sm:$0xff]
    %v899 = vld [vmem:[#allocation8 + $0x218] sm:$0xff]
    %v900 = vld [vmem:[#allocation8 + $0x220] sm:$0xff]
    %v901 = vld [vmem:[#allocation8 + $0x228] sm:$0xff]
    %v902 = vld [vmem:[#allocation8 + $0x230] sm:$0xff]
    %v903 = vld [vmem:[#allocation8 + $0x238] sm:$0xff]
    %v904 = vld [vmem:[#allocation8 + $0x240] sm:$0xff]
    %v905 = vld [vmem:[#allocation8 + $0x248] sm:$0xff]
    %v906 = vld [vmem:[#allocation8 + $0x250] sm:$0xff]
    %v907 = vld [vmem:[#allocation8 + $0x258] sm:$0xff]
    %v908 = vld [vmem:[#allocation8 + $0x260] sm:$0xff]
    %v909 = vld [vmem:[#allocation8 + $0x268] sm:$0xff]
    %v910 = vld [vmem:[#allocation8 + $0x270] sm:$0xff]
    %v911 = vld [vmem:[#allocation8 + $0x278] sm:$0xff]
    %v912 = vld [vmem:[#allocation8 + $0x280] sm:$0xff]
    %v913 = vld [vmem:[#allocation8 + $0x288] sm:$0xff]
    %v914 = vld [vmem:[#allocation8 + $0x290] sm:$0xff]
    %v915 = vld [vmem:[#allocation8 + $0x298] sm:$0xff]
    %v916 = vld [vmem:[#allocation8 + $0x2a0] sm:$0xff]
    %v917 = vld [vmem:[#allocation8 + $0x2a8] sm:$0xff]
    %v918 = vld [vmem:[#allocation8 + $0x2b0] sm:$0xff]
    %v919 = vld [vmem:[#allocation8 + $0x2b8] sm:$0xff]
    %v920 = vld [vmem:[#allocation8 + $0x2c0] sm:$0xff]
    %v921 = vld [vmem:[#allocation8 + $0x2c8] sm:$0xff]
    %v922 = vld [vmem:[#allocation8 + $0x2d0] sm:$0xff]
    %v923 = vld [vmem:[#allocation8 + $0x2d8] sm:$0xff]
    %v924 = vld [vmem:[#allocation8 + $0x2e0] sm:$0xff]
    %v925 = vld [vmem:[#allocation8 + $0x2e8] sm:$0xff]
    %v926 = vld [vmem:[#allocation8 + $0x2f0] sm:$0xff]
    %v927 = vld [vmem:[#allocation8 + $0x2f8] sm:$0xff]
    %v928 = vld [vmem:[#allocation8 + $0x300] sm:$0xff]
    %v929 = vld [vmem:[#allocation8 + $0x308] sm:$0xff]
    %v930 = vld [vmem:[#allocation8 + $0x310] sm:$0xff]
    %v931 = vld [vmem:[#allocation8 + $0x318] sm:$0xff]
    %v932 = vld [vmem:[#allocation8 + $0x320] sm:$0xff]
    %v933 = vld [vmem:[#allocation8 + $0x328] sm:$0xff]
    %v934 = vld [vmem:[#allocation8 + $0x330] sm:$0xff]
    %v935 = vld [vmem:[#allocation8 + $0x338] sm:$0xff]
    %v936 = vld [vmem:[#allocation8 + $0x340] sm:$0xff]
    %v937 = vld [vmem:[#allocation8 + $0x348] sm:$0xff]
    %v938 = vld [vmem:[#allocation8 + $0x350] sm:$0xff]
    %v939 = vld [vmem:[#allocation8 + $0x358] sm:$0xff]
    %v940 = vld [vmem:[#allocation8 + $0x360] sm:$0xff]
    %v941 = vld [vmem:[#allocation8 + $0x368] sm:$0xff]
    %v942 = vld [vmem:[#allocation8 + $0x370] sm:$0xff]
    %v943 = vld [vmem:[#allocation8 + $0x378] sm:$0xff]
    %v944 = vld [vmem:[#allocation8 + $0x380] sm:$0xff]
    %v945 = vld [vmem:[#allocation8 + $0x388] sm:$0xff]
    %v946 = vld [vmem:[#allocation8 + $0x390] sm:$0xff]
    %v947 = vld [vmem:[#allocation8 + $0x398] sm:$0xff]
    %v948 = vld [vmem:[#allocation8 + $0x3a0] sm:$0xff]
    %v949 = vld [vmem:[#allocation8 + $0x3a8] sm:$0xff]
    %v950 = vld [vmem:[#allocation8 + $0x3b0] sm:$0xff]
    %v951 = vld [vmem:[#allocation8 + $0x3b8] sm:$0xff]
    %v952 = vld [vmem:[#allocation8 + $0x3c0] sm:$0xff]
    %v953 = vld [vmem:[#allocation8 + $0x3c8] sm:$0xff]
    %v954 = vld [vmem:[#allocation8 + $0x3d0] sm:$0xff]
    %v955 = vld [vmem:[#allocation8 + $0x3d8] sm:$0xff]
    %v956 = vld [vmem:[#allocation8 + $0x3e0] sm:$0xff]
    %v957 = vld [vmem:[#allocation8 + $0x3e8] sm:$0xff]
    %v958 = vld [vmem:[#allocation8 + $0x3f0] sm:$0xff]
    %v959 = vld [vmem:[#allocation8 + $0x3f8] sm:$0xff]
    %v960 = vld [vmem:[%s5] sm:$0xf]
    %v962 = vlaneseq
    %v963 = vshrl.u32 %v962, 7
    %v964 = vsub.s32 0, %v963
    %v965 = vrot.slane %v960, %v964
    %v966 = vlaneseq
    %v967 = vshrl.u32 %v966, 7
    %v968 = vsub.s32 1, %v967
    %v969 = vrot.slane %v960, %v968
    %v970 = vlaneseq
    %v971 = vshrl.u32 %v970, 7
    %v972 = vsub.s32 2, %v971
    %v973 = vrot.slane %v960, %v972
    %v974 = vlaneseq
    %v975 = vshrl.u32 %v974, 7
    %v976 = vsub.s32 3, %v975
    %v977 = vrot.slane %v960, %v976
    %v1110 = vunpack.c.l.b16 %v832
    %v1111 = vunpack.c.h.b16 %v832
    %v1112 = vunpack.c.l.b16 %v833
    %v1113 = vunpack.c.h.b16 %v833
    %v1114 = vunpack.c.l.b16 %v834
    %v1115 = vunpack.c.h.b16 %v834
    %v1116 = vunpack.c.l.b16 %v835
    %v1117 = vunpack.c.h.b16 %v835
    %v1118 = vunpack.c.l.b16 %v836
    %v1119 = vunpack.c.h.b16 %v836
    %v1120 = vunpack.c.l.b16 %v837
    %v1121 = vunpack.c.h.b16 %v837
    %v1122 = vunpack.c.l.b16 %v838
    %v1123 = vunpack.c.h.b16 %v838
    %v1124 = vunpack.c.l.b16 %v839
    %v1125 = vunpack.c.h.b16 %v839
    %v1126 = vunpack.c.l.b16 %v840
    %v1127 = vunpack.c.h.b16 %v840
    %v1128 = vunpack.c.l.b16 %v841
    %v1129 = vunpack.c.h.b16 %v841
    %v1130 = vunpack.c.l.b16 %v842
    %v1131 = vunpack.c.h.b16 %v842
    %v1132 = vunpack.c.l.b16 %v843
    %v1133 = vunpack.c.h.b16 %v843
    %v1134 = vunpack.c.l.b16 %v844
    %v1135 = vunpack.c.h.b16 %v844
    %v1136 = vunpack.c.l.b16 %v845
    %v1137 = vunpack.c.h.b16 %v845
    %v1138 = vunpack.c.l.b16 %v846
    %v1139 = vunpack.c.h.b16 %v846
    %v1140 = vunpack.c.l.b16 %v847
    %v1141 = vunpack.c.h.b16 %v847
    %v1142 = vunpack.c.l.b16 %v848
    %v1143 = vunpack.c.h.b16 %v848
    %v1144 = vunpack.c.l.b16 %v849
    %v1145 = vunpack.c.h.b16 %v849
    %v1146 = vunpack.c.l.b16 %v850
    %v1147 = vunpack.c.h.b16 %v850
    %v1148 = vunpack.c.l.b16 %v851
    %v1149 = vunpack.c.h.b16 %v851
    %v1150 = vunpack.c.l.b16 %v852
    %v1151 = vunpack.c.h.b16 %v852
    %v1152 = vunpack.c.l.b16 %v853
    %v1153 = vunpack.c.h.b16 %v853
    %v1154 = vunpack.c.l.b16 %v854
    %v1155 = vunpack.c.h.b16 %v854
    %v1156 = vunpack.c.l.b16 %v855
    %v1157 = vunpack.c.h.b16 %v855
    %v1158 = vunpack.c.l.b16 %v856
    %v1159 = vunpack.c.h.b16 %v856
    %v1160 = vunpack.c.l.b16 %v857
    %v1161 = vunpack.c.h.b16 %v857
    %v1162 = vunpack.c.l.b16 %v858
    %v1163 = vunpack.c.h.b16 %v858
    %v1164 = vunpack.c.l.b16 %v859
    %v1165 = vunpack.c.h.b16 %v859
    %v1166 = vunpack.c.l.b16 %v860
    %v1167 = vunpack.c.h.b16 %v860
    %v1168 = vunpack.c.l.b16 %v861
    %v1169 = vunpack.c.h.b16 %v861
    %v1170 = vunpack.c.l.b16 %v862
    %v1171 = vunpack.c.h.b16 %v862
    %v1172 = vunpack.c.l.b16 %v863
    %v1173 = vunpack.c.h.b16 %v863
    %v1174 = vunpack.c.l.b16 %v864
    %v1175 = vunpack.c.h.b16 %v864
    %v1176 = vunpack.c.l.b16 %v865
    %v1177 = vunpack.c.h.b16 %v865
    %v1178 = vunpack.c.l.b16 %v866
    %v1179 = vunpack.c.h.b16 %v866
    %v1180 = vunpack.c.l.b16 %v867
    %v1181 = vunpack.c.h.b16 %v867
    %v1182 = vunpack.c.l.b16 %v868
    %v1183 = vunpack.c.h.b16 %v868
    %v1184 = vunpack.c.l.b16 %v869
    %v1185 = vunpack.c.h.b16 %v869
    %v1186 = vunpack.c.l.b16 %v870
    %v1187 = vunpack.c.h.b16 %v870
    %v1188 = vunpack.c.l.b16 %v871
    %v1189 = vunpack.c.h.b16 %v871
    %v1190 = vunpack.c.l.b16 %v872
    %v1191 = vunpack.c.h.b16 %v872
    %v1192 = vunpack.c.l.b16 %v873
    %v1193 = vunpack.c.h.b16 %v873
    %v1194 = vunpack.c.l.b16 %v874
    %v1195 = vunpack.c.h.b16 %v874
    %v1196 = vunpack.c.l.b16 %v875
    %v1197 = vunpack.c.h.b16 %v875
    %v1198 = vunpack.c.l.b16 %v876
    %v1199 = vunpack.c.h.b16 %v876
    %v1200 = vunpack.c.l.b16 %v877
    %v1201 = vunpack.c.h.b16 %v877
    %v1202 = vunpack.c.l.b16 %v878
    %v1203 = vunpack.c.h.b16 %v878
    %v1204 = vunpack.c.l.b16 %v879
    %v1205 = vunpack.c.h.b16 %v879
    %v1206 = vunpack.c.l.b16 %v880
    %v1207 = vunpack.c.h.b16 %v880
    %v1208 = vunpack.c.l.b16 %v881
    %v1209 = vunpack.c.h.b16 %v881
    %v1210 = vunpack.c.l.b16 %v882
    %v1211 = vunpack.c.h.b16 %v882
    %v1212 = vunpack.c.l.b16 %v883
    %v1213 = vunpack.c.h.b16 %v883
    %v1214 = vunpack.c.l.b16 %v884
    %v1215 = vunpack.c.h.b16 %v884
    %v1216 = vunpack.c.l.b16 %v885
    %v1217 = vunpack.c.h.b16 %v885
    %v1218 = vunpack.c.l.b16 %v886
    %v1219 = vunpack.c.h.b16 %v886
    %v1220 = vunpack.c.l.b16 %v887
    %v1221 = vunpack.c.h.b16 %v887
    %v1222 = vunpack.c.l.b16 %v888
    %v1223 = vunpack.c.h.b16 %v888
    %v1224 = vunpack.c.l.b16 %v889
    %v1225 = vunpack.c.h.b16 %v889
    %v1226 = vunpack.c.l.b16 %v890
    %v1227 = vunpack.c.h.b16 %v890
    %v1228 = vunpack.c.l.b16 %v891
    %v1229 = vunpack.c.h.b16 %v891
    %v1230 = vunpack.c.l.b16 %v892
    %v1231 = vunpack.c.h.b16 %v892
    %v1232 = vunpack.c.l.b16 %v893
    %v1233 = vunpack.c.h.b16 %v893
    %v1234 = vunpack.c.l.b16 %v894
    %v1235 = vunpack.c.h.b16 %v894
    %v1236 = vunpack.c.l.b16 %v895
    %v1237 = vunpack.c.h.b16 %v895
    %v1238 = vunpack.c.l.b16 %v896
    %v1239 = vunpack.c.h.b16 %v896
    %v1240 = vunpack.c.l.b16 %v897
    %v1241 = vunpack.c.h.b16 %v897
    %v1242 = vunpack.c.l.b16 %v898
    %v1243 = vunpack.c.h.b16 %v898
    %v1244 = vunpack.c.l.b16 %v899
    %v1245 = vunpack.c.h.b16 %v899
    %v1246 = vunpack.c.l.b16 %v900
    %v1247 = vunpack.c.h.b16 %v900
    %v1248 = vunpack.c.l.b16 %v901
    %v1249 = vunpack.c.h.b16 %v901
    %v1250 = vunpack.c.l.b16 %v902
    %v1251 = vunpack.c.h.b16 %v902
    %v1252 = vunpack.c.l.b16 %v903
    %v1253 = vunpack.c.h.b16 %v903
    %v1254 = vunpack.c.l.b16 %v904
    %v1255 = vunpack.c.h.b16 %v904
    %v1256 = vunpack.c.l.b16 %v905
    %v1257 = vunpack.c.h.b16 %v905
    %v1258 = vunpack.c.l.b16 %v906
    %v1259 = vunpack.c.h.b16 %v906
    %v1260 = vunpack.c.l.b16 %v907
    %v1261 = vunpack.c.h.b16 %v907
    %v1262 = vunpack.c.l.b16 %v908
    %v1263 = vunpack.c.h.b16 %v908
    %v1264 = vunpack.c.l.b16 %v909
    %v1265 = vunpack.c.h.b16 %v909
    %v1266 = vunpack.c.l.b16 %v910
    %v1267 = vunpack.c.h.b16 %v910
    %v1268 = vunpack.c.l.b16 %v911
    %v1269 = vunpack.c.h.b16 %v911
    %v1270 = vunpack.c.l.b16 %v912
    %v1271 = vunpack.c.h.b16 %v912
    %v1272 = vunpack.c.l.b16 %v913
    %v1273 = vunpack.c.h.b16 %v913
    %v1274 = vunpack.c.l.b16 %v914
    %v1275 = vunpack.c.h.b16 %v914
    %v1276 = vunpack.c.l.b16 %v915
    %v1277 = vunpack.c.h.b16 %v915
    %v1278 = vunpack.c.l.b16 %v916
    %v1279 = vunpack.c.h.b16 %v916
    %v1280 = vunpack.c.l.b16 %v917
    %v1281 = vunpack.c.h.b16 %v917
    %v1282 = vunpack.c.l.b16 %v918
    %v1283 = vunpack.c.h.b16 %v918
    %v1284 = vunpack.c.l.b16 %v919
    %v1285 = vunpack.c.h.b16 %v919
    %v1286 = vunpack.c.l.b16 %v920
    %v1287 = vunpack.c.h.b16 %v920
    %v1288 = vunpack.c.l.b16 %v921
    %v1289 = vunpack.c.h.b16 %v921
    %v1290 = vunpack.c.l.b16 %v922
    %v1291 = vunpack.c.h.b16 %v922
    %v1292 = vunpack.c.l.b16 %v923
    %v1293 = vunpack.c.h.b16 %v923
    %v1294 = vunpack.c.l.b16 %v924
    %v1295 = vunpack.c.h.b16 %v924
    %v1296 = vunpack.c.l.b16 %v925
    %v1297 = vunpack.c.h.b16 %v925
    %v1298 = vunpack.c.l.b16 %v926
    %v1299 = vunpack.c.h.b16 %v926
    %v1300 = vunpack.c.l.b16 %v927
    %v1301 = vunpack.c.h.b16 %v927
    %v1302 = vunpack.c.l.b16 %v928
    %v1303 = vunpack.c.h.b16 %v928
    %v1304 = vunpack.c.l.b16 %v929
    %v1305 = vunpack.c.h.b16 %v929
    %v1306 = vunpack.c.l.b16 %v930
    %v1307 = vunpack.c.h.b16 %v930
    %v1308 = vunpack.c.l.b16 %v931
    %v1309 = vunpack.c.h.b16 %v931
    %v1310 = vunpack.c.l.b16 %v932
    %v1311 = vunpack.c.h.b16 %v932
    %v1312 = vunpack.c.l.b16 %v933
    %v1313 = vunpack.c.h.b16 %v933
    %v1314 = vunpack.c.l.b16 %v934
    %v1315 = vunpack.c.h.b16 %v934
    %v1316 = vunpack.c.l.b16 %v935
    %v1317 = vunpack.c.h.b16 %v935
    %v1318 = vunpack.c.l.b16 %v936
    %v1319 = vunpack.c.h.b16 %v936
    %v1320 = vunpack.c.l.b16 %v937
    %v1321 = vunpack.c.h.b16 %v937
    %v1322 = vunpack.c.l.b16 %v938
    %v1323 = vunpack.c.h.b16 %v938
    %v1324 = vunpack.c.l.b16 %v939
    %v1325 = vunpack.c.h.b16 %v939
    %v1326 = vunpack.c.l.b16 %v940
    %v1327 = vunpack.c.h.b16 %v940
    %v1328 = vunpack.c.l.b16 %v941
    %v1329 = vunpack.c.h.b16 %v941
    %v1330 = vunpack.c.l.b16 %v942
    %v1331 = vunpack.c.h.b16 %v942
    %v1332 = vunpack.c.l.b16 %v943
    %v1333 = vunpack.c.h.b16 %v943
    %v1334 = vunpack.c.l.b16 %v944
    %v1335 = vunpack.c.h.b16 %v944
    %v1336 = vunpack.c.l.b16 %v945
    %v1337 = vunpack.c.h.b16 %v945
    %v1338 = vunpack.c.l.b16 %v946
    %v1339 = vunpack.c.h.b16 %v946
    %v1340 = vunpack.c.l.b16 %v947
    %v1341 = vunpack.c.h.b16 %v947
    %v1342 = vunpack.c.l.b16 %v948
    %v1343 = vunpack.c.h.b16 %v948
    %v1344 = vunpack.c.l.b16 %v949
    %v1345 = vunpack.c.h.b16 %v949
    %v1346 = vunpack.c.l.b16 %v950
    %v1347 = vunpack.c.h.b16 %v950
    %v1348 = vunpack.c.l.b16 %v951
    %v1349 = vunpack.c.h.b16 %v951
    %v1350 = vunpack.c.l.b16 %v952
    %v1351 = vunpack.c.h.b16 %v952
    %v1352 = vunpack.c.l.b16 %v953
    %v1353 = vunpack.c.h.b16 %v953
    %v1354 = vunpack.c.l.b16 %v954
    %v1355 = vunpack.c.h.b16 %v954
    %v1356 = vunpack.c.l.b16 %v955
    %v1357 = vunpack.c.h.b16 %v955
    %v1358 = vunpack.c.l.b16 %v956
    %v1359 = vunpack.c.h.b16 %v956
    %v1360 = vunpack.c.l.b16 %v957
    %v1361 = vunpack.c.h.b16 %v957
    %v1362 = vunpack.c.l.b16 %v958
    %v1363 = vunpack.c.h.b16 %v958
    %v1364 = vunpack.c.l.b16 %v959
    %v1365 = vunpack.c.h.b16 %v959
    %v1366 = vpack.c.b16 %v1114, %v1110
    %v1367 = vpack.c.b16 %v1115, %v1111
    %v1368 = vpack.c.b16 %v1116, %v1112
    %v1369 = vpack.c.b16 %v1117, %v1113
    %v1370 = vpack.c.b16 %v1122, %v1118
    %v1371 = vpack.c.b16 %v1123, %v1119
    %v1372 = vpack.c.b16 %v1124, %v1120
    %v1373 = vpack.c.b16 %v1125, %v1121
    %v1374 = vpack.c.b16 %v1130, %v1126
    %v1375 = vpack.c.b16 %v1131, %v1127
    %v1376 = vpack.c.b16 %v1132, %v1128
    %v1377 = vpack.c.b16 %v1133, %v1129
    %v1378 = vpack.c.b16 %v1138, %v1134
    %v1379 = vpack.c.b16 %v1139, %v1135
    %v1380 = vpack.c.b16 %v1140, %v1136
    %v1381 = vpack.c.b16 %v1141, %v1137
    %v1382 = vpack.c.b16 %v1146, %v1142
    %v1383 = vpack.c.b16 %v1147, %v1143
    %v1384 = vpack.c.b16 %v1148, %v1144
    %v1385 = vpack.c.b16 %v1149, %v1145
    %v1386 = vpack.c.b16 %v1154, %v1150
    %v1387 = vpack.c.b16 %v1155, %v1151
    %v1388 = vpack.c.b16 %v1156, %v1152
    %v1389 = vpack.c.b16 %v1157, %v1153
    %v1390 = vpack.c.b16 %v1162, %v1158
    %v1391 = vpack.c.b16 %v1163, %v1159
    %v1392 = vpack.c.b16 %v1164, %v1160
    %v1393 = vpack.c.b16 %v1165, %v1161
    %v1394 = vpack.c.b16 %v1170, %v1166
    %v1395 = vpack.c.b16 %v1171, %v1167
    %v1396 = vpack.c.b16 %v1172, %v1168
    %v1397 = vpack.c.b16 %v1173, %v1169
    %v1398 = vpack.c.b16 %v1178, %v1174
    %v1399 = vpack.c.b16 %v1179, %v1175
    %v1400 = vpack.c.b16 %v1180, %v1176
    %v1401 = vpack.c.b16 %v1181, %v1177
    %v1402 = vpack.c.b16 %v1186, %v1182
    %v1403 = vpack.c.b16 %v1187, %v1183
    %v1404 = vpack.c.b16 %v1188, %v1184
    %v1405 = vpack.c.b16 %v1189, %v1185
    %v1406 = vpack.c.b16 %v1194, %v1190
    %v1407 = vpack.c.b16 %v1195, %v1191
    %v1408 = vpack.c.b16 %v1196, %v1192
    %v1409 = vpack.c.b16 %v1197, %v1193
    %v1410 = vpack.c.b16 %v1202, %v1198
    %v1411 = vpack.c.b16 %v1203, %v1199
    %v1412 = vpack.c.b16 %v1204, %v1200
    %v1413 = vpack.c.b16 %v1205, %v1201
    %v1414 = vpack.c.b16 %v1210, %v1206
    %v1415 = vpack.c.b16 %v1211, %v1207
    %v1416 = vpack.c.b16 %v1212, %v1208
    %v1417 = vpack.c.b16 %v1213, %v1209
    %v1418 = vpack.c.b16 %v1218, %v1214
    %v1419 = vpack.c.b16 %v1219, %v1215
    %v1420 = vpack.c.b16 %v1220, %v1216
    %v1421 = vpack.c.b16 %v1221, %v1217
    %v1422 = vpack.c.b16 %v1226, %v1222
    %v1423 = vpack.c.b16 %v1227, %v1223
    %v1424 = vpack.c.b16 %v1228, %v1224
    %v1425 = vpack.c.b16 %v1229, %v1225
    %v1426 = vpack.c.b16 %v1234, %v1230
    %v1427 = vpack.c.b16 %v1235, %v1231
    %v1428 = vpack.c.b16 %v1236, %v1232
    %v1429 = vpack.c.b16 %v1237, %v1233
    %v1430 = vpack.c.b16 %v1242, %v1238
    %v1431 = vpack.c.b16 %v1243, %v1239
    %v1432 = vpack.c.b16 %v1244, %v1240
    %v1433 = vpack.c.b16 %v1245, %v1241
    %v1434 = vpack.c.b16 %v1250, %v1246
    %v1435 = vpack.c.b16 %v1251, %v1247
    %v1436 = vpack.c.b16 %v1252, %v1248
    %v1437 = vpack.c.b16 %v1253, %v1249
    %v1438 = vpack.c.b16 %v1258, %v1254
    %v1439 = vpack.c.b16 %v1259, %v1255
    %v1440 = vpack.c.b16 %v1260, %v1256
    %v1441 = vpack.c.b16 %v1261, %v1257
    %v1442 = vpack.c.b16 %v1266, %v1262
    %v1443 = vpack.c.b16 %v1267, %v1263
    %v1444 = vpack.c.b16 %v1268, %v1264
    %v1445 = vpack.c.b16 %v1269, %v1265
    %v1446 = vpack.c.b16 %v1274, %v1270
    %v1447 = vpack.c.b16 %v1275, %v1271
    %v1448 = vpack.c.b16 %v1276, %v1272
    %v1449 = vpack.c.b16 %v1277, %v1273
    %v1450 = vpack.c.b16 %v1282, %v1278
    %v1451 = vpack.c.b16 %v1283, %v1279
    %v1452 = vpack.c.b16 %v1284, %v1280
    %v1453 = vpack.c.b16 %v1285, %v1281
    %v1454 = vpack.c.b16 %v1290, %v1286
    %v1455 = vpack.c.b16 %v1291, %v1287
    %v1456 = vpack.c.b16 %v1292, %v1288
    %v1457 = vpack.c.b16 %v1293, %v1289
    %v1458 = vpack.c.b16 %v1298, %v1294
    %v1459 = vpack.c.b16 %v1299, %v1295
    %v1460 = vpack.c.b16 %v1300, %v1296
    %v1461 = vpack.c.b16 %v1301, %v1297
    %v1462 = vpack.c.b16 %v1306, %v1302
    %v1463 = vpack.c.b16 %v1307, %v1303
    %v1464 = vpack.c.b16 %v1308, %v1304
    %v1465 = vpack.c.b16 %v1309, %v1305
    %v1466 = vpack.c.b16 %v1314, %v1310
    %v1467 = vpack.c.b16 %v1315, %v1311
    %v1468 = vpack.c.b16 %v1316, %v1312
    %v1469 = vpack.c.b16 %v1317, %v1313
    %v1470 = vpack.c.b16 %v1322, %v1318
    %v1471 = vpack.c.b16 %v1323, %v1319
    %v1472 = vpack.c.b16 %v1324, %v1320
    %v1473 = vpack.c.b16 %v1325, %v1321
    %v1474 = vpack.c.b16 %v1330, %v1326
    %v1475 = vpack.c.b16 %v1331, %v1327
    %v1476 = vpack.c.b16 %v1332, %v1328
    %v1477 = vpack.c.b16 %v1333, %v1329
    %v1478 = vpack.c.b16 %v1338, %v1334
    %v1479 = vpack.c.b16 %v1339, %v1335
    %v1480 = vpack.c.b16 %v1340, %v1336
    %v1481 = vpack.c.b16 %v1341, %v1337
    %v1482 = vpack.c.b16 %v1346, %v1342
    %v1483 = vpack.c.b16 %v1347, %v1343
    %v1484 = vpack.c.b16 %v1348, %v1344
    %v1485 = vpack.c.b16 %v1349, %v1345
    %v1486 = vpack.c.b16 %v1354, %v1350
    %v1487 = vpack.c.b16 %v1355, %v1351
    %v1488 = vpack.c.b16 %v1356, %v1352
    %v1489 = vpack.c.b16 %v1357, %v1353
    %v1490 = vpack.c.b16 %v1362, %v1358
    %v1491 = vpack.c.b16 %v1363, %v1359
    %v1492 = vpack.c.b16 %v1364, %v1360
    %v1493 = vpack.c.b16 %v1365, %v1361
    %1622 = vmatprep.subr.bf16.mxu0 %v1367
    %1623 = vmatpush1.bf16.msra.mxu0 %v1366
    %1624 = vmatprep.subr.bf16.mxu0 %v1371
    %1625 = vmatpush1.bf16.msra.mxu0 %v1370
    %1626 = vmatprep.subr.bf16.mxu0 %v1375
    %1627 = vmatpush1.bf16.msra.mxu0 %v1374
    %1628 = vmatprep.subr.bf16.mxu0 %v1379
    %1629 = vmatpush1.bf16.msra.mxu0 %v1378
    %1630 = vmatprep.subr.bf16.mxu0 %v1383
    %1631 = vmatpush1.bf16.msra.mxu0 %v1382
    %1632 = vmatprep.subr.bf16.mxu0 %v1387
    %1633 = vmatpush1.bf16.msra.mxu0 %v1386
    %1634 = vmatprep.subr.bf16.mxu0 %v1391
    %1635 = vmatpush1.bf16.msra.mxu0 %v1390
    %1636 = vmatprep.subr.bf16.mxu0 %v1395
    %1637 = vmatpush1.bf16.msra.mxu0 %v1394
    %1638 = vmatprep.subr.bf16.mxu0 %v1399
    %1639 = vmatpush1.bf16.msra.mxu0 %v1398
    %1640 = vmatprep.subr.bf16.mxu0 %v1403
    %1641 = vmatpush1.bf16.msra.mxu0 %v1402
    %1642 = vmatprep.subr.bf16.mxu0 %v1407
    %1643 = vmatpush1.bf16.msra.mxu0 %v1406
    %1644 = vmatprep.subr.bf16.mxu0 %v1411
    %1645 = vmatpush1.bf16.msra.mxu0 %v1410
    %1646 = vmatprep.subr.bf16.mxu0 %v1415
    %1647 = vmatpush1.bf16.msra.mxu0 %v1414
    %1648 = vmatprep.subr.bf16.mxu0 %v1419
    %1649 = vmatpush1.bf16.msra.mxu0 %v1418
    %1650 = vmatprep.subr.bf16.mxu0 %v1423
    %1651 = vmatpush1.bf16.msra.mxu0 %v1422
    %1652 = vmatprep.subr.bf16.mxu0 %v1427
    %1653 = vmatpush1.bf16.msra.mxu0 %v1426
    %1654 = vmatprep.mubr.bf16.mxu0 %v801
    %1655 = vmatmul.mubr.bf16.gmra.mrb[0].mxu0 %v800
    %v1656 = vpop.f32.mrb[0].mxu0
    %v1657 = vadd.f32 %v965, %v1656
    %v1658 = vpop.f32.mrb[0].mxu0
    %v1659 = vadd.f32 %v969, %v1658
    %v1660 = vpop.f32.mrb[0].mxu0
    %v1661 = vadd.f32 %v965, %v1660
    %v1662 = vpop.f32.mrb[0].mxu0
    %v1663 = vadd.f32 %v969, %v1662
    %1664 = vmatprep.mubr.bf16.mxu0 %v805
    %1665 = vmatmul.mubr.bf16.gmra.mrb[0].mxu0 %v804
    %v1666 = vpop.f32.mrb[0].mxu0
    %v1667 = vadd.f32 %v965, %v1666
    %v1668 = vpop.f32.mrb[0].mxu0
    %v1669 = vadd.f32 %v969, %v1668
    %v1670 = vpop.f32.mrb[0].mxu0
    %v1671 = vadd.f32 %v965, %v1670
    %v1672 = vpop.f32.mrb[0].mxu0
    %v1673 = vadd.f32 %v969, %v1672
    %1674 = vmatprep.mubr.bf16.mxu0 %v809
    %1675 = vmatmul.mubr.bf16.gmra.mrb[0].mxu0 %v808
    %v1676 = vpop.f32.mrb[0].mxu0
    %v1677 = vadd.f32 %v965, %v1676
    %v1678 = vpop.f32.mrb[0].mxu0
    %v1679 = vadd.f32 %v969, %v1678
    %v1680 = vpop.f32.mrb[0].mxu0
    %v1681 = vadd.f32 %v965, %v1680
    %v1682 = vpop.f32.mrb[0].mxu0
    %v1683 = vadd.f32 %v969, %v1682
    %1684 = vmatprep.mubr.bf16.mxu0 %v813
    %1685 = vmatmul.mubr.bf16.gmra.mrb[0].mxu0 %v812
    %v1686 = vpop.f32.mrb[0].mxu0
    %v1687 = vadd.f32 %v965, %v1686
    %v1688 = vpop.f32.mrb[0].mxu0
    %v1689 = vadd.f32 %v969, %v1688
    %v1690 = vpop.f32.mrb[0].mxu0
    %v1691 = vadd.f32 %v965, %v1690
    %v1692 = vpop.f32.mrb[0].mxu0
    %v1693 = vadd.f32 %v969, %v1692
    %1694 = vmatprep.mubr.bf16.mxu0 %v817
    %1695 = vmatmul.mubr.bf16.gmra.mrb[0].mxu0 %v816
    %v1696 = vpop.f32.mrb[0].mxu0
    %v1697 = vadd.f32 %v965, %v1696
    %v1698 = vpop.f32.mrb[0].mxu0
    %v1699 = vadd.f32 %v969, %v1698
    %v1700 = vpop.f32.mrb[0].mxu0
    %v1701 = vadd.f32 %v965, %v1700
    %v1702 = vpop.f32.mrb[0].mxu0
    %v1703 = vadd.f32 %v969, %v1702
    %1704 = vmatprep.mubr.bf16.mxu0 %v821
    %1705 = vmatmul.mubr.bf16.gmra.mrb[0].mxu0 %v820
    %v1706 = vpop.f32.mrb[0].mxu0
    %v1707 = vadd.f32 %v965, %v1706
    %v1708 = vpop.f32.mrb[0].mxu0
    %v1709 = vadd.f32 %v969, %v1708
    %v1710 = vpop.f32.mrb[0].mxu0
    %v1711 = vadd.f32 %v965, %v1710
    %v1712 = vpop.f32.mrb[0].mxu0
    %v1713 = vadd.f32 %v969, %v1712
    %1714 = vmatprep.mubr.bf16.mxu0 %v825
    %1715 = vmatmul.mubr.bf16.gmra.mrb[0].mxu0 %v824
    %v1716 = vpop.f32.mrb[0].mxu0
    %v1717 = vadd.f32 %v965, %v1716
    %v1718 = vpop.f32.mrb[0].mxu0
    %v1719 = vadd.f32 %v969, %v1718
    %v1720 = vpop.f32.mrb[0].mxu0
    %v1721 = vadd.f32 %v965, %v1720
    %v1722 = vpop.f32.mrb[0].mxu0
    %v1723 = vadd.f32 %v969, %v1722
    %1724 = vmatprep.mubr.bf16.mxu0 %v829
    %1725 = vmatmul.mubr.bf16.gmra.mrb[0].mxu0 %v828
    %v1726 = vpop.f32.mrb[0].mxu0
    %v1727 = vadd.f32 %v965, %v1726
    %v1728 = vpop.f32.mrb[0].mxu0
    %v1729 = vadd.f32 %v969, %v1728
    %v1730 = vpop.f32.mrb[0].mxu0
    %v1731 = vadd.f32 %v965, %v1730
    %v1732 = vpop.f32.mrb[0].mxu0
    %v1733 = vadd.f32 %v969, %v1732
    %1734 = vdwg.mxu0
    %1735 = vmatprep.subr.bf16.mxu0 %v1431
    %1736 = vmatpush1.bf16.msra.mxu0 %v1430
    %1737 = vmatprep.subr.bf16.mxu0 %v1435
    %1738 = vmatpush1.bf16.msra.mxu0 %v1434
    %1739 = vmatprep.subr.bf16.mxu0 %v1439
    %1740 = vmatpush1.bf16.msra.mxu0 %v1438
    %1741 = vmatprep.subr.bf16.mxu0 %v1443
    %1742 = vmatpush1.bf16.msra.mxu0 %v1442
    %1743 = vmatprep.subr.bf16.mxu0 %v1447
    %1744 = vmatpush1.bf16.msra.mxu0 %v1446
    %1745 = vmatprep.subr.bf16.mxu0 %v1451
    %1746 = vmatpush1.bf16.msra.mxu0 %v1450
    %1747 = vmatprep.subr.bf16.mxu0 %v1455
    %1748 = vmatpush1.bf16.msra.mxu0 %v1454
    %1749 = vmatprep.subr.bf16.mxu0 %v1459
    %1750 = vmatpush1.bf16.msra.mxu0 %v1458
    %1751 = vmatprep.subr.bf16.mxu0 %v1463
    %1752 = vmatpush1.bf16.msra.mxu0 %v1462
    %1753 = vmatprep.subr.bf16.mxu0 %v1467
    %1754 = vmatpush1.bf16.msra.mxu0 %v1466
    %1755 = vmatprep.subr.bf16.mxu0 %v1471
    %1756 = vmatpush1.bf16.msra.mxu0 %v1470
    %1757 = vmatprep.subr.bf16.mxu0 %v1475
    %1758 = vmatpush1.bf16.msra.mxu0 %v1474
    %1759 = vmatprep.subr.bf16.mxu0 %v1479
    %1760 = vmatpush1.bf16.msra.mxu0 %v1478
    %1761 = vmatprep.subr.bf16.mxu0 %v1483
    %1762 = vmatpush1.bf16.msra.mxu0 %v1482
    %1763 = vmatprep.subr.bf16.mxu0 %v1487
    %1764 = vmatpush1.bf16.msra.mxu0 %v1486
    %1765 = vmatprep.subr.bf16.mxu0 %v1491
    %1766 = vmatpush1.bf16.msra.mxu0 %v1490
    %1767 = vmatprep.mubr.bf16.mxu0 %v803
    %1768 = vmatmul.mubr.bf16.gmra.mrb[0].mxu0 %v802
    %v1769 = vpop.f32.mrb[0].mxu0
    %v1770 = vadd.f32 %v1657, %v1769
    %v1771 = vpop.f32.mrb[0].mxu0
    %v1772 = vadd.f32 %v1659, %v1771
    %v1773 = vpop.f32.mrb[0].mxu0
    %v1774 = vadd.f32 %v1661, %v1773
    %v1775 = vpop.f32.mrb[0].mxu0
    %v1776 = vadd.f32 %v1663, %v1775
    %1777 = vmatprep.mubr.bf16.mxu0 %v807
    %1778 = vmatmul.mubr.bf16.gmra.mrb[0].mxu0 %v806
    %v1779 = vpop.f32.mrb[0].mxu0
    %v1780 = vadd.f32 %v1667, %v1779
    %v1781 = vpop.f32.mrb[0].mxu0
    %v1782 = vadd.f32 %v1669, %v1781
    %v1783 = vpop.f32.mrb[0].mxu0
    %v1784 = vadd.f32 %v1671, %v1783
    %v1785 = vpop.f32.mrb[0].mxu0
    %v1786 = vadd.f32 %v1673, %v1785
    %1787 = vmatprep.mubr.bf16.mxu0 %v811
    %1788 = vmatmul.mubr.bf16.gmra.mrb[0].mxu0 %v810
    %v1789 = vpop.f32.mrb[0].mxu0
    %v1790 = vadd.f32 %v1677, %v1789
    %v1791 = vpop.f32.mrb[0].mxu0
    %v1792 = vadd.f32 %v1679, %v1791
    %v1793 = vpop.f32.mrb[0].mxu0
    %v1794 = vadd.f32 %v1681, %v1793
    %v1795 = vpop.f32.mrb[0].mxu0
    %v1796 = vadd.f32 %v1683, %v1795
    %1797 = vmatprep.mubr.bf16.mxu0 %v815
    %1798 = vmatmul.mubr.bf16.gmra.mrb[0].mxu0 %v814
    %v1799 = vpop.f32.mrb[0].mxu0
    %v1800 = vadd.f32 %v1687, %v1799
    %v1801 = vpop.f32.mrb[0].mxu0
    %v1802 = vadd.f32 %v1689, %v1801
    %v1803 = vpop.f32.mrb[0].mxu0
    %v1804 = vadd.f32 %v1691, %v1803
    %v1805 = vpop.f32.mrb[0].mxu0
    %v1806 = vadd.f32 %v1693, %v1805
    %1807 = vmatprep.mubr.bf16.mxu0 %v819
    %1808 = vmatmul.mubr.bf16.gmra.mrb[0].mxu0 %v818
    %v1809 = vpop.f32.mrb[0].mxu0
    %v1810 = vadd.f32 %v1697, %v1809
    %v1811 = vpop.f32.mrb[0].mxu0
    %v1812 = vadd.f32 %v1699, %v1811
    %v1813 = vpop.f32.mrb[0].mxu0
    %v1814 = vadd.f32 %v1701, %v1813
    %v1815 = vpop.f32.mrb[0].mxu0
    %v1816 = vadd.f32 %v1703, %v1815
    %1817 = vmatprep.mubr.bf16.mxu0 %v823
    %1818 = vmatmul.mubr.bf16.gmra.mrb[0].mxu0 %v822
    %v1819 = vpop.f32.mrb[0].mxu0
    %v1820 = vadd.f32 %v1707, %v1819
    %v1821 = vpop.f32.mrb[0].mxu0
    %v1822 = vadd.f32 %v1709, %v1821
    %v1823 = vpop.f32.mrb[0].mxu0
    %v1824 = vadd.f32 %v1711, %v1823
    %v1825 = vpop.f32.mrb[0].mxu0
    %v1826 = vadd.f32 %v1713, %v1825
    %1827 = vmatprep.mubr.bf16.mxu0 %v827
    %1828 = vmatmul.mubr.bf16.gmra.mrb[0].mxu0 %v826
    %v1829 = vpop.f32.mrb[0].mxu0
    %v1830 = vadd.f32 %v1717, %v1829
    %v1831 = vpop.f32.mrb[0].mxu0
    %v1832 = vadd.f32 %v1719, %v1831
    %v1833 = vpop.f32.mrb[0].mxu0
    %v1834 = vadd.f32 %v1721, %v1833
    %v1835 = vpop.f32.mrb[0].mxu0
    %v1836 = vadd.f32 %v1723, %v1835
    %1837 = vmatprep.mubr.bf16.mxu0 %v831
    %1838 = vmatmul.mubr.bf16.gmra.mrb[0].mxu0 %v830
    %v1839 = vpop.f32.mrb[0].mxu0
    %v1840 = vadd.f32 %v1727, %v1839
    %v1841 = vpop.f32.mrb[0].mxu0
    %v1842 = vadd.f32 %v1729, %v1841
    %v1843 = vpop.f32.mrb[0].mxu0
    %v1844 = vadd.f32 %v1731, %v1843
    %v1845 = vpop.f32.mrb[0].mxu0
    %v1846 = vadd.f32 %v1733, %v1845
    %1847 = vdwg.mxu0
    %1848 = vmatprep.subr.bf16.mxu0 %v1369
    %1849 = vmatpush1.bf16.msra.mxu0 %v1368
    %1850 = vmatprep.subr.bf16.mxu0 %v1373
    %1851 = vmatpush1.bf16.msra.mxu0 %v1372
    %1852 = vmatprep.subr.bf16.mxu0 %v1377
    %1853 = vmatpush1.bf16.msra.mxu0 %v1376
    %1854 = vmatprep.subr.bf16.mxu0 %v1381
    %1855 = vmatpush1.bf16.msra.mxu0 %v1380
    %1856 = vmatprep.subr.bf16.mxu0 %v1385
    %1857 = vmatpush1.bf16.msra.mxu0 %v1384
    %1858 = vmatprep.subr.bf16.mxu0 %v1389
    %1859 = vmatpush1.bf16.msra.mxu0 %v1388
    %1860 = vmatprep.subr.bf16.mxu0 %v1393
    %1861 = vmatpush1.bf16.msra.mxu0 %v1392
    %1862 = vmatprep.subr.bf16.mxu0 %v1397
    %1863 = vmatpush1.bf16.msra.mxu0 %v1396
    %1864 = vmatprep.subr.bf16.mxu0 %v1401
    %1865 = vmatpush1.bf16.msra.mxu0 %v1400
    %1866 = vmatprep.subr.bf16.mxu0 %v1405
    %1867 = vmatpush1.bf16.msra.mxu0 %v1404
    %1868 = vmatprep.subr.bf16.mxu0 %v1409
    %1869 = vmatpush1.bf16.msra.mxu0 %v1408
    %1870 = vmatprep.subr.bf16.mxu0 %v1413
    %1871 = vmatpush1.bf16.msra.mxu0 %v1412
    %1872 = vmatprep.subr.bf16.mxu0 %v1417
    %1873 = vmatpush1.bf16.msra.mxu0 %v1416
    %1874 = vmatprep.subr.bf16.mxu0 %v1421
    %1875 = vmatpush1.bf16.msra.mxu0 %v1420
    %1876 = vmatprep.subr.bf16.mxu0 %v1425
    %1877 = vmatpush1.bf16.msra.mxu0 %v1424
    %1878 = vmatprep.subr.bf16.mxu0 %v1429
    %1879 = vmatpush1.bf16.msra.mxu0 %v1428
    %1880 = vmatprep.mubr.bf16.mxu0 %v801
    %1881 = vmatmul.mubr.bf16.gmra.mrb[0].mxu0 %v800
    %v1882 = vpop.f32.mrb[0].mxu0
    %v1883 = vadd.f32 %v973, %v1882
    %v1884 = vpop.f32.mrb[0].mxu0
    %v1885 = vadd.f32 %v977, %v1884
    %v1886 = vpop.f32.mrb[0].mxu0
    %v1887 = vadd.f32 %v973, %v1886
    %v1888 = vpop.f32.mrb[0].mxu0
    %v1889 = vadd.f32 %v977, %v1888
    %1890 = vmatprep.mubr.bf16.mxu0 %v805
    %1891 = vmatmul.mubr.bf16.gmra.mrb[0].mxu0 %v804
    %v1892 = vpop.f32.mrb[0].mxu0
    %v1893 = vadd.f32 %v973, %v1892
    %v1894 = vpop.f32.mrb[0].mxu0
    %v1895 = vadd.f32 %v977, %v1894
    %v1896 = vpop.f32.mrb[0].mxu0
    %v1897 = vadd.f32 %v973, %v1896
    %v1898 = vpop.f32.mrb[0].mxu0
    %v1899 = vadd.f32 %v977, %v1898
    %1900 = vmatprep.mubr.bf16.mxu0 %v809
    %1901 = vmatmul.mubr.bf16.gmra.mrb[0].mxu0 %v808
    %v1902 = vpop.f32.mrb[0].mxu0
    %v1903 = vadd.f32 %v973, %v1902
    %v1904 = vpop.f32.mrb[0].mxu0
    %v1905 = vadd.f32 %v977, %v1904
    %v1906 = vpop.f32.mrb[0].mxu0
    %v1907 = vadd.f32 %v973, %v1906
    %v1908 = vpop.f32.mrb[0].mxu0
    %v1909 = vadd.f32 %v977, %v1908
    %1910 = vmatprep.mubr.bf16.mxu0 %v813
    %1911 = vmatmul.mubr.bf16.gmra.mrb[0].mxu0 %v812
    %v1912 = vpop.f32.mrb[0].mxu0
    %v1913 = vadd.f32 %v973, %v1912
    %v1914 = vpop.f32.mrb[0].mxu0
    %v1915 = vadd.f32 %v977, %v1914
    %v1916 = vpop.f32.mrb[0].mxu0
    %v1917 = vadd.f32 %v973, %v1916
    %v1918 = vpop.f32.mrb[0].mxu0
    %v1919 = vadd.f32 %v977, %v1918
    %1920 = vmatprep.mubr.bf16.mxu0 %v817
    %1921 = vmatmul.mubr.bf16.gmra.mrb[0].mxu0 %v816
    %v1922 = vpop.f32.mrb[0].mxu0
    %v1923 = vadd.f32 %v973, %v1922
    %v1924 = vpop.f32.mrb[0].mxu0
    %v1925 = vadd.f32 %v977, %v1924
    %v1926 = vpop.f32.mrb[0].mxu0
    %v1927 = vadd.f32 %v973, %v1926
    %v1928 = vpop.f32.mrb[0].mxu0
    %v1929 = vadd.f32 %v977, %v1928
    %1930 = vmatprep.mubr.bf16.mxu0 %v821
    %1931 = vmatmul.mubr.bf16.gmra.mrb[0].mxu0 %v820
    %v1932 = vpop.f32.mrb[0].mxu0
    %v1933 = vadd.f32 %v973, %v1932
    %v1934 = vpop.f32.mrb[0].mxu0
    %v1935 = vadd.f32 %v977, %v1934
    %v1936 = vpop.f32.mrb[0].mxu0
    %v1937 = vadd.f32 %v973, %v1936
    %v1938 = vpop.f32.mrb[0].mxu0
    %v1939 = vadd.f32 %v977, %v1938
    %1940 = vmatprep.mubr.bf16.mxu0 %v825
    %1941 = vmatmul.mubr.bf16.gmra.mrb[0].mxu0 %v824
    %v1942 = vpop.f32.mrb[0].mxu0
    %v1943 = vadd.f32 %v973, %v1942
    %v1944 = vpop.f32.mrb[0].mxu0
    %v1945 = vadd.f32 %v977, %v1944
    %v1946 = vpop.f32.mrb[0].mxu0
    %v1947 = vadd.f32 %v973, %v1946
    %v1948 = vpop.f32.mrb[0].mxu0
    %v1949 = vadd.f32 %v977, %v1948
    %1950 = vmatprep.mubr.bf16.mxu0 %v829
    %1951 = vmatmul.mubr.bf16.gmra.mrb[0].mxu0 %v828
    %v1952 = vpop.f32.mrb[0].mxu0
    %v1953 = vadd.f32 %v973, %v1952
    %v1954 = vpop.f32.mrb[0].mxu0
    %v1955 = vadd.f32 %v977, %v1954
    %v1956 = vpop.f32.mrb[0].mxu0
    %v1957 = vadd.f32 %v973, %v1956
    %v1958 = vpop.f32.mrb[0].mxu0
    %v1959 = vadd.f32 %v977, %v1958
    %1960 = vdwg.mxu0
    %1961 = vmatprep.subr.bf16.mxu0 %v1433
    %1962 = vmatpush1.bf16.msra.mxu0 %v1432
    %1963 = vmatprep.subr.bf16.mxu0 %v1437
    %1964 = vmatpush1.bf16.msra.mxu0 %v1436
    %1965 = vmatprep.subr.bf16.mxu0 %v1441
    %1966 = vmatpush1.bf16.msra.mxu0 %v1440
    %1967 = vmatprep.subr.bf16.mxu0 %v1445
    %1968 = vmatpush1.bf16.msra.mxu0 %v1444
    %1969 = vmatprep.subr.bf16.mxu0 %v1449
    %1970 = vmatpush1.bf16.msra.mxu0 %v1448
    %1971 = vmatprep.subr.bf16.mxu0 %v1453
    %1972 = vmatpush1.bf16.msra.mxu0 %v1452
    %1973 = vmatprep.subr.bf16.mxu0 %v1457
    %1974 = vmatpush1.bf16.msra.mxu0 %v1456
    %1975 = vmatprep.subr.bf16.mxu0 %v1461
    %1976 = vmatpush1.bf16.msra.mxu0 %v1460
    %1977 = vmatprep.subr.bf16.mxu0 %v1465
    %1978 = vmatpush1.bf16.msra.mxu0 %v1464
    %1979 = vmatprep.subr.bf16.mxu0 %v1469
    %1980 = vmatpush1.bf16.msra.mxu0 %v1468
    %1981 = vmatprep.subr.bf16.mxu0 %v1473
    %1982 = vmatpush1.bf16.msra.mxu0 %v1472
    %1983 = vmatprep.subr.bf16.mxu0 %v1477
    %1984 = vmatpush1.bf16.msra.mxu0 %v1476
    %1985 = vmatprep.subr.bf16.mxu0 %v1481
    %1986 = vmatpush1.bf16.msra.mxu0 %v1480
    %1987 = vmatprep.subr.bf16.mxu0 %v1485
    %1988 = vmatpush1.bf16.msra.mxu0 %v1484
    %1989 = vmatprep.subr.bf16.mxu0 %v1489
    %1990 = vmatpush1.bf16.msra.mxu0 %v1488
    %1991 = vmatprep.subr.bf16.mxu0 %v1493
    %1992 = vmatpush1.bf16.msra.mxu0 %v1492
    %1993 = vmatprep.mubr.bf16.mxu0 %v803
    %1994 = vmatmul.mubr.bf16.gmra.mrb[0].mxu0 %v802
    %v1995 = vpop.f32.mrb[0].mxu0
    %v1996 = vadd.f32 %v1883, %v1995
    %v1997 = vpop.f32.mrb[0].mxu0
    %v1998 = vadd.f32 %v1885, %v1997
    %v1999 = vpop.f32.mrb[0].mxu0
    %v2000 = vadd.f32 %v1887, %v1999
    %v2001 = vpop.f32.mrb[0].mxu0
    %v2002 = vadd.f32 %v1889, %v2001
    %2003 = vmatprep.mubr.bf16.mxu0 %v807
    %2004 = vmatmul.mubr.bf16.gmra.mrb[0].mxu0 %v806
    %v2005 = vpop.f32.mrb[0].mxu0
    %v2006 = vadd.f32 %v1893, %v2005
    %v2007 = vpop.f32.mrb[0].mxu0
    %v2008 = vadd.f32 %v1895, %v2007
    %v2009 = vpop.f32.mrb[0].mxu0
    %v2010 = vadd.f32 %v1897, %v2009
    %v2011 = vpop.f32.mrb[0].mxu0
    %v2012 = vadd.f32 %v1899, %v2011
    %2013 = vmatprep.mubr.bf16.mxu0 %v811
    %2014 = vmatmul.mubr.bf16.gmra.mrb[0].mxu0 %v810
    %v2015 = vpop.f32.mrb[0].mxu0
    %v2016 = vadd.f32 %v1903, %v2015
    %v2017 = vpop.f32.mrb[0].mxu0
    %v2018 = vadd.f32 %v1905, %v2017
    %v2019 = vpop.f32.mrb[0].mxu0
    %v2020 = vadd.f32 %v1907, %v2019
    %v2021 = vpop.f32.mrb[0].mxu0
    %v2022 = vadd.f32 %v1909, %v2021
    %2023 = vmatprep.mubr.bf16.mxu0 %v815
    %2024 = vmatmul.mubr.bf16.gmra.mrb[0].mxu0 %v814
    %v2025 = vpop.f32.mrb[0].mxu0
    %v2026 = vadd.f32 %v1913, %v2025
    %v2027 = vpop.f32.mrb[0].mxu0
    %v2028 = vadd.f32 %v1915, %v2027
    %v2029 = vpop.f32.mrb[0].mxu0
    %v2030 = vadd.f32 %v1917, %v2029
    %v2031 = vpop.f32.mrb[0].mxu0
    %v2032 = vadd.f32 %v1919, %v2031
    %2033 = vmatprep.mubr.bf16.mxu0 %v819
    %2034 = vmatmul.mubr.bf16.gmra.mrb[0].mxu0 %v818
    %v2035 = vpop.f32.mrb[0].mxu0
    %v2036 = vadd.f32 %v1923, %v2035
    %v2037 = vpop.f32.mrb[0].mxu0
    %v2038 = vadd.f32 %v1925, %v2037
    %v2039 = vpop.f32.mrb[0].mxu0
    %v2040 = vadd.f32 %v1927, %v2039
    %v2041 = vpop.f32.mrb[0].mxu0
    %v2042 = vadd.f32 %v1929, %v2041
    %2043 = vmatprep.mubr.bf16.mxu0 %v823
    %2044 = vmatmul.mubr.bf16.gmra.mrb[0].mxu0 %v822
    %v2045 = vpop.f32.mrb[0].mxu0
    %v2046 = vadd.f32 %v1933, %v2045
    %v2047 = vpop.f32.mrb[0].mxu0
    %v2048 = vadd.f32 %v1935, %v2047
    %v2049 = vpop.f32.mrb[0].mxu0
    %v2050 = vadd.f32 %v1937, %v2049
    %v2051 = vpop.f32.mrb[0].mxu0
    %v2052 = vadd.f32 %v1939, %v2051
    %2053 = vmatprep.mubr.bf16.mxu0 %v827
    %2054 = vmatmul.mubr.bf16.gmra.mrb[0].mxu0 %v826
    %v2055 = vpop.f32.mrb[0].mxu0
    %v2056 = vadd.f32 %v1943, %v2055
    %v2057 = vpop.f32.mrb[0].mxu0
    %v2058 = vadd.f32 %v1945, %v2057
    %v2059 = vpop.f32.mrb[0].mxu0
    %v2060 = vadd.f32 %v1947, %v2059
    %v2061 = vpop.f32.mrb[0].mxu0
    %v2062 = vadd.f32 %v1949, %v2061
    %2063 = vmatprep.mubr.bf16.mxu0 %v831
    %2064 = vmatmul.mubr.bf16.gmra.mrb[0].mxu0 %v830
    %v2065 = vpop.f32.mrb[0].mxu0
    %v2066 = vadd.f32 %v1953, %v2065
    %v2067 = vpop.f32.mrb[0].mxu0
    %v2068 = vadd.f32 %v1955, %v2067
    %v2069 = vpop.f32.mrb[0].mxu0
    %v2070 = vadd.f32 %v1957, %v2069
    %v2071 = vpop.f32.mrb[0].mxu0
    %v2072 = vadd.f32 %v1959, %v2071
    %2073 = vdwg.mxu0
    %v2074 = vmax.f32 %v1770, 0.0
    %v2075 = vmax.f32 %v1772, 0.0
    %v2076 = vmax.f32 %v1996, 0.0
    %v2077 = vmax.f32 %v1998, 0.0
    %v2078 = vmax.f32 %v1774, 0.0
    %v2079 = vmax.f32 %v1776, 0.0
    %v2080 = vmax.f32 %v2000, 0.0
    %v2081 = vmax.f32 %v2002, 0.0
    %v2082 = vmax.f32 %v1780, 0.0
    %v2083 = vmax.f32 %v1782, 0.0
    %v2084 = vmax.f32 %v2006, 0.0
    %v2085 = vmax.f32 %v2008, 0.0
    %v2086 = vmax.f32 %v1784, 0.0
    %v2087 = vmax.f32 %v1786, 0.0
    %v2088 = vmax.f32 %v2010, 0.0
    %v2089 = vmax.f32 %v2012, 0.0
    %v2090 = vmax.f32 %v1790, 0.0
    %v2091 = vmax.f32 %v1792, 0.0
    %v2092 = vmax.f32 %v2016, 0.0
    %v2093 = vmax.f32 %v2018, 0.0
    %v2094 = vmax.f32 %v1794, 0.0
    %v2095 = vmax.f32 %v1796, 0.0
    %v2096 = vmax.f32 %v2020, 0.0
    %v2097 = vmax.f32 %v2022, 0.0
    %v2098 = vmax.f32 %v1800, 0.0
    %v2099 = vmax.f32 %v1802, 0.0
    %v2100 = vmax.f32 %v2026, 0.0
    %v2101 = vmax.f32 %v2028, 0.0
    %v2102 = vmax.f32 %v1804, 0.0
    %v2103 = vmax.f32 %v1806, 0.0
    %v2104 = vmax.f32 %v2030, 0.0
    %v2105 = vmax.f32 %v2032, 0.0
    %v2106 = vmax.f32 %v1810, 0.0
    %v2107 = vmax.f32 %v1812, 0.0
    %v2108 = vmax.f32 %v2036, 0.0
    %v2109 = vmax.f32 %v2038, 0.0
    %v2110 = vmax.f32 %v1814, 0.0
    %v2111 = vmax.f32 %v1816, 0.0
    %v2112 = vmax.f32 %v2040, 0.0
    %v2113 = vmax.f32 %v2042, 0.0
    %v2114 = vmax.f32 %v1820, 0.0
    %v2115 = vmax.f32 %v1822, 0.0
    %v2116 = vmax.f32 %v2046, 0.0
    %v2117 = vmax.f32 %v2048, 0.0
    %v2118 = vmax.f32 %v1824, 0.0
    %v2119 = vmax.f32 %v1826, 0.0
    %v2120 = vmax.f32 %v2050, 0.0
    %v2121 = vmax.f32 %v2052, 0.0
    %v2122 = vmax.f32 %v1830, 0.0
    %v2123 = vmax.f32 %v1832, 0.0
    %v2124 = vmax.f32 %v2056, 0.0
    %v2125 = vmax.f32 %v2058, 0.0
    %v2126 = vmax.f32 %v1834, 0.0
    %v2127 = vmax.f32 %v1836, 0.0
    %v2128 = vmax.f32 %v2060, 0.0
    %v2129 = vmax.f32 %v2062, 0.0
    %v2130 = vmax.f32 %v1840, 0.0
    %v2131 = vmax.f32 %v1842, 0.0
    %v2132 = vmax.f32 %v2066, 0.0
    %v2133 = vmax.f32 %v2068, 0.0
    %v2134 = vmax.f32 %v1844, 0.0
    %v2135 = vmax.f32 %v1846, 0.0
    %v2136 = vmax.f32 %v2070, 0.0
    %v2137 = vmax.f32 %v2072, 0.0
    %v2138 = vld [vmem:[%s6] sm:$0xf]
    %v2140 = vlaneseq
    %v2141 = vshrl.u32 %v2140, 7
    %v2142 = vsub.s32 0, %v2141
    %v2143 = vrot.slane %v2138, %v2142
    %v2144 = vlaneseq
    %v2145 = vshrl.u32 %v2144, 7
    %v2146 = vsub.s32 1, %v2145
    %v2147 = vrot.slane %v2138, %v2146
    %v2148 = vlaneseq
    %v2149 = vshrl.u32 %v2148, 7
    %v2150 = vsub.s32 2, %v2149
    %v2151 = vrot.slane %v2138, %v2150
    %v2152 = vlaneseq
    %v2153 = vshrl.u32 %v2152, 7
    %v2154 = vsub.s32 3, %v2153
    %v2155 = vrot.slane %v2138, %v2154
    %v2160 = vmul.f32 %v2074, %v2143
    %v2161 = vmul.f32 %v2075, %v2147
    %v2162 = vmul.f32 %v2076, %v2151
    %v2163 = vmul.f32 %v2077, %v2155
    %v2164 = vmul.f32 %v2078, %v2143
    %v2165 = vmul.f32 %v2079, %v2147
    %v2166 = vmul.f32 %v2080, %v2151
    %v2167 = vmul.f32 %v2081, %v2155
    %v2168 = vmul.f32 %v2082, %v2143
    %v2169 = vmul.f32 %v2083, %v2147
    %v2170 = vmul.f32 %v2084, %v2151
    %v2171 = vmul.f32 %v2085, %v2155
    %v2172 = vmul.f32 %v2086, %v2143
    %v2173 = vmul.f32 %v2087, %v2147
    %v2174 = vmul.f32 %v2088, %v2151
    %v2175 = vmul.f32 %v2089, %v2155
    %v2176 = vmul.f32 %v2090, %v2143
    %v2177 = vmul.f32 %v2091, %v2147
    %v2178 = vmul.f32 %v2092, %v2151
    %v2179 = vmul.f32 %v2093, %v2155
    %v2180 = vmul.f32 %v2094, %v2143
    %v2181 = vmul.f32 %v2095, %v2147
    %v2182 = vmul.f32 %v2096, %v2151
    %v2183 = vmul.f32 %v2097, %v2155
    %v2184 = vmul.f32 %v2098, %v2143
    %v2185 = vmul.f32 %v2099, %v2147
    %v2186 = vmul.f32 %v2100, %v2151
    %v2187 = vmul.f32 %v2101, %v2155
    %v2188 = vmul.f32 %v2102, %v2143
    %v2189 = vmul.f32 %v2103, %v2147
    %v2190 = vmul.f32 %v2104, %v2151
    %v2191 = vmul.f32 %v2105, %v2155
    %v2192 = vmul.f32 %v2106, %v2143
    %v2193 = vmul.f32 %v2107, %v2147
    %v2194 = vmul.f32 %v2108, %v2151
    %v2195 = vmul.f32 %v2109, %v2155
    %v2196 = vmul.f32 %v2110, %v2143
    %v2197 = vmul.f32 %v2111, %v2147
    %v2198 = vmul.f32 %v2112, %v2151
    %v2199 = vmul.f32 %v2113, %v2155
    %v2200 = vmul.f32 %v2114, %v2143
    %v2201 = vmul.f32 %v2115, %v2147
    %v2202 = vmul.f32 %v2116, %v2151
    %v2203 = vmul.f32 %v2117, %v2155
    %v2204 = vmul.f32 %v2118, %v2143
    %v2205 = vmul.f32 %v2119, %v2147
    %v2206 = vmul.f32 %v2120, %v2151
    %v2207 = vmul.f32 %v2121, %v2155
    %v2208 = vmul.f32 %v2122, %v2143
    %v2209 = vmul.f32 %v2123, %v2147
    %v2210 = vmul.f32 %v2124, %v2151
    %v2211 = vmul.f32 %v2125, %v2155
    %v2212 = vmul.f32 %v2126, %v2143
    %v2213 = vmul.f32 %v2127, %v2147
    %v2214 = vmul.f32 %v2128, %v2151
    %v2215 = vmul.f32 %v2129, %v2155
    %v2216 = vmul.f32 %v2130, %v2143
    %v2217 = vmul.f32 %v2131, %v2147
    %v2218 = vmul.f32 %v2132, %v2151
    %v2219 = vmul.f32 %v2133, %v2155
    %v2220 = vmul.f32 %v2134, %v2143
    %v2221 = vmul.f32 %v2135, %v2147
    %v2222 = vmul.f32 %v2136, %v2151
    %v2223 = vmul.f32 %v2137, %v2155
    %v2224 = vadd.f32 %v2160, %v2161
    %v2225 = vadd.f32 %v2224, %v2162
    %v2226 = vadd.f32 %v2225, %v2163
    %2227 = vadd.xlane.f32.xlu0 %v2226
    %v2228 = vpop.xlane.xlu0 %2227
    %v2229 = vadd.f32 %v2164, %v2165
    %v2230 = vadd.f32 %v2229, %v2166
    %v2231 = vadd.f32 %v2230, %v2167
    %2232 = vadd.xlane.f32.xlu0 %v2231
    %v2233 = vpop.xlane.xlu0 %2232
    %v2234 = vadd.f32 %v2168, %v2169
    %v2235 = vadd.f32 %v2234, %v2170
    %v2236 = vadd.f32 %v2235, %v2171
    %2237 = vadd.xlane.f32.xlu0 %v2236
    %v2238 = vpop.xlane.xlu0 %2237
    %v2239 = vadd.f32 %v2172, %v2173
    %v2240 = vadd.f32 %v2239, %v2174
    %v2241 = vadd.f32 %v2240, %v2175
    %2242 = vadd.xlane.f32.xlu0 %v2241
    %v2243 = vpop.xlane.xlu0 %2242
    %v2244 = vadd.f32 %v2176, %v2177
    %v2245 = vadd.f32 %v2244, %v2178
    %v2246 = vadd.f32 %v2245, %v2179
    %2247 = vadd.xlane.f32.xlu0 %v2246
    %v2248 = vpop.xlane.xlu0 %2247
    %v2249 = vadd.f32 %v2180, %v2181
    %v2250 = vadd.f32 %v2249, %v2182
    %v2251 = vadd.f32 %v2250, %v2183
    %2252 = vadd.xlane.f32.xlu0 %v2251
    %v2253 = vpop.xlane.xlu0 %2252
    %v2254 = vadd.f32 %v2184, %v2185
    %v2255 = vadd.f32 %v2254, %v2186
    %v2256 = vadd.f32 %v2255, %v2187
    %2257 = vadd.xlane.f32.xlu0 %v2256
    %v2258 = vpop.xlane.xlu0 %2257
    %v2259 = vadd.f32 %v2188, %v2189
    %v2260 = vadd.f32 %v2259, %v2190
    %v2261 = vadd.f32 %v2260, %v2191
    %2262 = vadd.xlane.f32.xlu0 %v2261
    %v2263 = vpop.xlane.xlu0 %2262
    %v2264 = vadd.f32 %v2192, %v2193
    %v2265 = vadd.f32 %v2264, %v2194
    %v2266 = vadd.f32 %v2265, %v2195
    %2267 = vadd.xlane.f32.xlu0 %v2266
    %v2268 = vpop.xlane.xlu0 %2267
    %v2269 = vadd.f32 %v2196, %v2197
    %v2270 = vadd.f32 %v2269, %v2198
    %v2271 = vadd.f32 %v2270, %v2199
    %2272 = vadd.xlane.f32.xlu0 %v2271
    %v2273 = vpop.xlane.xlu0 %2272
    %v2274 = vadd.f32 %v2200, %v2201
    %v2275 = vadd.f32 %v2274, %v2202
    %v2276 = vadd.f32 %v2275, %v2203
    %2277 = vadd.xlane.f32.xlu0 %v2276
    %v2278 = vpop.xlane.xlu0 %2277
    %v2279 = vadd.f32 %v2204, %v2205
    %v2280 = vadd.f32 %v2279, %v2206
    %v2281 = vadd.f32 %v2280, %v2207
    %2282 = vadd.xlane.f32.xlu0 %v2281
    %v2283 = vpop.xlane.xlu0 %2282
    %v2284 = vadd.f32 %v2208, %v2209
    %v2285 = vadd.f32 %v2284, %v2210
    %v2286 = vadd.f32 %v2285, %v2211
    %2287 = vadd.xlane.f32.xlu0 %v2286
    %v2288 = vpop.xlane.xlu0 %2287
    %v2289 = vadd.f32 %v2212, %v2213
    %v2290 = vadd.f32 %v2289, %v2214
    %v2291 = vadd.f32 %v2290, %v2215
    %2292 = vadd.xlane.f32.xlu0 %v2291
    %v2293 = vpop.xlane.xlu0 %2292
    %v2294 = vadd.f32 %v2216, %v2217
    %v2295 = vadd.f32 %v2294, %v2218
    %v2296 = vadd.f32 %v2295, %v2219
    %2297 = vadd.xlane.f32.xlu0 %v2296
    %v2298 = vpop.xlane.xlu0 %2297
    %v2299 = vadd.f32 %v2220, %v2221
    %v2300 = vadd.f32 %v2299, %v2222
    %v2301 = vadd.f32 %v2300, %v2223
    %2302 = vadd.xlane.f32.xlu0 %v2301
    %v2303 = vpop.xlane.xlu0 %2302
    %v2304 = vld [vmem:[%s0] sm:$0xff]
    %v2305 = vcombine.high %v2304, %v2304
    %v2307 = vunpack.c.l.s4 1966171168
    %v2308 = vunpack.c.0.s8 %v2307
    %v2309 = vlaneseq
    %v2310 = vshrl.u32 %v2309, 7
    %v2311 = vsub.s32 %v2308, %v2310
    %v2312 = vrot.slane %v2304, %v2311
    %v2314 = vunpack.c.l.s4 1966171168
    %v2315 = vunpack.c.0.s8 %v2314
    %v2316 = vlaneseq
    %v2317 = vshrl.u32 %v2316, 7
    %v2318 = vsub.s32 %v2315, %v2317
    %v2319 = vrot.slane %v2305, %v2318
    %v2320 = vcombine.high %v2312, %v2312
    %v2321 = vcombine.high %v2319, %v2319
    %v2323 = vunpack.c.l.s4 1966171168
    %v2324 = vunpack.c.0.s8 %v2323
    %v2325 = vlaneseq
    %v2326 = vshrl.u32 %v2325, 7
    %v2327 = vsub.s32 %v2324, %v2326
    %v2328 = vrot.slane %v2312, %v2327
    %v2330 = vunpack.c.l.s4 1966171168
    %v2331 = vunpack.c.0.s8 %v2330
    %v2332 = vlaneseq
    %v2333 = vshrl.u32 %v2332, 7
    %v2334 = vsub.s32 %v2331, %v2333
    %v2335 = vrot.slane %v2319, %v2334
    %v2337 = vunpack.c.l.s4 1966171168
    %v2338 = vunpack.c.0.s8 %v2337
    %v2339 = vlaneseq
    %v2340 = vshrl.u32 %v2339, 7
    %v2341 = vsub.s32 %v2338, %v2340
    %v2342 = vrot.slane %v2320, %v2341
    %v2344 = vunpack.c.l.s4 1966171168
    %v2345 = vunpack.c.0.s8 %v2344
    %v2346 = vlaneseq
    %v2347 = vshrl.u32 %v2346, 7
    %v2348 = vsub.s32 %v2345, %v2347
    %v2349 = vrot.slane %v2321, %v2348
    %v2350 = vcombine.high %v2328, %v2328
    %v2351 = vcombine.high %v2335, %v2335
    %v2352 = vcombine.high %v2342, %v2342
    %v2353 = vcombine.high %v2349, %v2349
    %v2354 = vlaneseq
    %v2355 = vshrl.u32 %v2354, 7
    %v2356 = vadd.s32 %v2355, 8
    %v2357 = vlaneseq
    %v2358 = vshrl.u32 %v2357, 7
    %v2359 = vsub.s32 0, %v2358
    %v2360 = vrot.slane %v2328, %v2359
    %v2361 = vlaneseq
    %v2362 = vshrl.u32 %v2361, 7
    %v2363 = vsub.s32 0, %v2362
    %v2364 = vrot.slane %v2342, %v2363
    %v2365 = vlaneseq
    %v2366 = vshrl.u32 %v2365, 7
    %v2367 = vsub.s32 0, %v2366
    %v2368 = vrot.slane %v2350, %v2367
    %v2369 = vlaneseq
    %v2370 = vshrl.u32 %v2369, 7
    %v2371 = vsub.s32 0, %v2370
    %v2372 = vrot.slane %v2352, %v2371
    %v2373 = vlaneseq
    %v2374 = vshrl.u32 %v2373, 7
    %v2375 = vsub.s32 0, %v2374
    %v2376 = vrot.slane %v2335, %v2375
    %v2377 = vlaneseq
    %v2378 = vshrl.u32 %v2377, 7
    %v2379 = vsub.s32 0, %v2378
    %v2380 = vrot.slane %v2349, %v2379
    %v2381 = vlaneseq
    %v2382 = vshrl.u32 %v2381, 7
    %v2383 = vsub.s32 0, %v2382
    %v2384 = vrot.slane %v2351, %v2383
    %v2385 = vlaneseq
    %v2386 = vshrl.u32 %v2385, 7
    %v2387 = vsub.s32 0, %v2386
    %v2388 = vrot.slane %v2353, %v2387
    %vm2389 = vcmp.lt.s32.totalorder %v2355, %v2360
    %vm2390 = vcmp.lt.s32.totalorder %v2356, %v2360
    %vm2391 = vcmp.lt.s32.totalorder %v2355, %v2364
    %vm2392 = vcmp.lt.s32.totalorder %v2356, %v2364
    %vm2393 = vcmp.lt.s32.totalorder %v2355, %v2368
    %vm2394 = vcmp.lt.s32.totalorder %v2356, %v2368
    %vm2395 = vcmp.lt.s32.totalorder %v2355, %v2372
    %vm2396 = vcmp.lt.s32.totalorder %v2356, %v2372
    %vm2397 = vcmp.lt.s32.totalorder %v2355, %v2376
    %vm2398 = vcmp.lt.s32.totalorder %v2356, %v2376
    %vm2399 = vcmp.lt.s32.totalorder %v2355, %v2380
    %vm2400 = vcmp.lt.s32.totalorder %v2356, %v2380
    %vm2401 = vcmp.lt.s32.totalorder %v2355, %v2384
    %vm2402 = vcmp.lt.s32.totalorder %v2356, %v2384
    %vm2403 = vcmp.lt.s32.totalorder %v2355, %v2388
    %vm2404 = vcmp.lt.s32.totalorder %v2356, %v2388
    %v2405 = vsel %vm2389, %v2228, -1e+30
    %v2406 = vsel %vm2390, %v2233, -1e+30
    %v2407 = vsel %vm2391, %v2238, -1e+30
    %v2408 = vsel %vm2392, %v2243, -1e+30
    %v2409 = vsel %vm2393, %v2248, -1e+30
    %v2410 = vsel %vm2394, %v2253, -1e+30
    %v2411 = vsel %vm2395, %v2258, -1e+30
    %v2412 = vsel %vm2396, %v2263, -1e+30
    %v2413 = vsel %vm2397, %v2268, -1e+30
    %v2414 = vsel %vm2398, %v2273, -1e+30
    %v2415 = vsel %vm2399, %v2278, -1e+30
    %v2416 = vsel %vm2400, %v2283, -1e+30
    %v2417 = vsel %vm2401, %v2288, -1e+30
    %v2418 = vsel %vm2402, %v2293, -1e+30
    %v2419 = vsel %vm2403, %v2298, -1e+30
    %v2420 = vsel %vm2404, %v2303, -1e+30
    %vm2421 = vcmask 7168
    %v2422 = vsel %vm2421, %v2405, -inf
    %v2423 = vsel %vm2421, %v2406, -inf
    %v2424 = vmax.f32 %v2422, %v2423
    %v2425 = vrot.slane %v2424, 4
    %v2426 = vmax.f32 %v2424, %v2425
    %v2427 = vrot.slane %v2426, 2
    %v2428 = vmax.f32 %v2426, %v2427
    %v2429 = vrot.slane %v2428, 1
    %v2430 = vmax.f32 %v2428, %v2429
    %v2431 = vsel %vm2421, %v2407, -inf
    %v2432 = vsel %vm2421, %v2408, -inf
    %v2433 = vmax.f32 %v2431, %v2432
    %v2434 = vrot.slane %v2433, 4
    %v2435 = vmax.f32 %v2433, %v2434
    %v2436 = vrot.slane %v2435, 2
    %v2437 = vmax.f32 %v2435, %v2436
    %v2438 = vrot.slane %v2437, 1
    %v2439 = vmax.f32 %v2437, %v2438
    %v2440 = vsel %vm2421, %v2409, -inf
    %v2441 = vsel %vm2421, %v2410, -inf
    %v2442 = vmax.f32 %v2440, %v2441
    %v2443 = vrot.slane %v2442, 4
    %v2444 = vmax.f32 %v2442, %v2443
    %v2445 = vrot.slane %v2444, 2
    %v2446 = vmax.f32 %v2444, %v2445
    %v2447 = vrot.slane %v2446, 1
    %v2448 = vmax.f32 %v2446, %v2447
    %v2449 = vsel %vm2421, %v2411, -inf
    %v2450 = vsel %vm2421, %v2412, -inf
    %v2451 = vmax.f32 %v2449, %v2450
    %v2452 = vrot.slane %v2451, 4
    %v2453 = vmax.f32 %v2451, %v2452
    %v2454 = vrot.slane %v2453, 2
    %v2455 = vmax.f32 %v2453, %v2454
    %v2456 = vrot.slane %v2455, 1
    %v2457 = vmax.f32 %v2455, %v2456
    %v2458 = vsel %vm2421, %v2413, -inf
    %v2459 = vsel %vm2421, %v2414, -inf
    %v2460 = vmax.f32 %v2458, %v2459
    %v2461 = vrot.slane %v2460, 4
    %v2462 = vmax.f32 %v2460, %v2461
    %v2463 = vrot.slane %v2462, 2
    %v2464 = vmax.f32 %v2462, %v2463
    %v2465 = vrot.slane %v2464, 1
    %v2466 = vmax.f32 %v2464, %v2465
    %v2467 = vsel %vm2421, %v2415, -inf
    %v2468 = vsel %vm2421, %v2416, -inf
    %v2469 = vmax.f32 %v2467, %v2468
    %v2470 = vrot.slane %v2469, 4
    %v2471 = vmax.f32 %v2469, %v2470
    %v2472 = vrot.slane %v2471, 2
    %v2473 = vmax.f32 %v2471, %v2472
    %v2474 = vrot.slane %v2473, 1
    %v2475 = vmax.f32 %v2473, %v2474
    %v2476 = vsel %vm2421, %v2417, -inf
    %v2477 = vsel %vm2421, %v2418, -inf
    %v2478 = vmax.f32 %v2476, %v2477
    %v2479 = vrot.slane %v2478, 4
    %v2480 = vmax.f32 %v2478, %v2479
    %v2481 = vrot.slane %v2480, 2
    %v2482 = vmax.f32 %v2480, %v2481
    %v2483 = vrot.slane %v2482, 1
    %v2484 = vmax.f32 %v2482, %v2483
    %v2485 = vsel %vm2421, %v2419, -inf
    %v2486 = vsel %vm2421, %v2420, -inf
    %v2487 = vmax.f32 %v2485, %v2486
    %v2488 = vrot.slane %v2487, 4
    %v2489 = vmax.f32 %v2487, %v2488
    %v2490 = vrot.slane %v2489, 2
    %v2491 = vmax.f32 %v2489, %v2490
    %v2492 = vrot.slane %v2491, 1
    %v2493 = vmax.f32 %v2491, %v2492
    %v2494 = vsub.f32 %v2405, %v2430
    %v2495 = vsub.f32 %v2406, %v2430
    %v2496 = vsub.f32 %v2407, %v2439
    %v2497 = vsub.f32 %v2408, %v2439
    %v2498 = vsub.f32 %v2409, %v2448
    %v2499 = vsub.f32 %v2410, %v2448
    %v2500 = vsub.f32 %v2411, %v2457
    %v2501 = vsub.f32 %v2412, %v2457
    %v2502 = vsub.f32 %v2413, %v2466
    %v2503 = vsub.f32 %v2414, %v2466
    %v2504 = vsub.f32 %v2415, %v2475
    %v2505 = vsub.f32 %v2416, %v2475
    %v2506 = vsub.f32 %v2417, %v2484
    %v2507 = vsub.f32 %v2418, %v2484
    %v2508 = vsub.f32 %v2419, %v2493
    %v2509 = vsub.f32 %v2420, %v2493
    %v2510 = vmul.f32 %v2494, 1.442695
    %v2511 = vpow.pop %v2510
    %v2512 = vmul.f32 %v2495, 1.442695
    %v2513 = vpow.pop %v2512
    %v2514 = vmul.f32 %v2496, 1.442695
    %v2515 = vpow.pop %v2514
    %v2516 = vmul.f32 %v2497, 1.442695
    %v2517 = vpow.pop %v2516
    %v2518 = vmul.f32 %v2498, 1.442695
    %v2519 = vpow.pop %v2518
    %v2520 = vmul.f32 %v2499, 1.442695
    %v2521 = vpow.pop %v2520
    %v2522 = vmul.f32 %v2500, 1.442695
    %v2523 = vpow.pop %v2522
    %v2524 = vmul.f32 %v2501, 1.442695
    %v2525 = vpow.pop %v2524
    %v2526 = vmul.f32 %v2502, 1.442695
    %v2527 = vpow.pop %v2526
    %v2528 = vmul.f32 %v2503, 1.442695
    %v2529 = vpow.pop %v2528
    %v2530 = vmul.f32 %v2504, 1.442695
    %v2531 = vpow.pop %v2530
    %v2532 = vmul.f32 %v2505, 1.442695
    %v2533 = vpow.pop %v2532
    %v2534 = vmul.f32 %v2506, 1.442695
    %v2535 = vpow.pop %v2534
    %v2536 = vmul.f32 %v2507, 1.442695
    %v2537 = vpow.pop %v2536
    %v2538 = vmul.f32 %v2508, 1.442695
    %v2539 = vpow.pop %v2538
    %v2540 = vmul.f32 %v2509, 1.442695
    %v2541 = vpow.pop %v2540
    %v2542 = vsel %vm2389, %v2511, 0.0
    %v2543 = vsel %vm2390, %v2513, 0.0
    %v2544 = vsel %vm2391, %v2515, 0.0
    %v2545 = vsel %vm2392, %v2517, 0.0
    %v2546 = vsel %vm2393, %v2519, 0.0
    %v2547 = vsel %vm2394, %v2521, 0.0
    %v2548 = vsel %vm2395, %v2523, 0.0
    %v2549 = vsel %vm2396, %v2525, 0.0
    %v2550 = vsel %vm2397, %v2527, 0.0
    %v2551 = vsel %vm2398, %v2529, 0.0
    %v2552 = vsel %vm2399, %v2531, 0.0
    %v2553 = vsel %vm2400, %v2533, 0.0
    %v2554 = vsel %vm2401, %v2535, 0.0
    %v2555 = vsel %vm2402, %v2537, 0.0
    %v2556 = vsel %vm2403, %v2539, 0.0
    %v2557 = vsel %vm2404, %v2541, 0.0
    %v2558 = vsel %vm2421, %v2542, 0.0
    %v2559 = vsel %vm2421, %v2543, 0.0
    %v2560 = vadd.f32 %v2558, %v2559
    %v2561 = vrot.slane %v2560, 4
    %v2562 = vadd.f32 %v2560, %v2561
    %v2563 = vrot.slane %v2562, 2
    %v2564 = vadd.f32 %v2562, %v2563
    %v2565 = vrot.slane %v2564, 1
    %v2566 = vadd.f32 %v2564, %v2565
    %v2567 = vsel %vm2421, %v2544, 0.0
    %v2568 = vsel %vm2421, %v2545, 0.0
    %v2569 = vadd.f32 %v2567, %v2568
    %v2570 = vrot.slane %v2569, 4
    %v2571 = vadd.f32 %v2569, %v2570
    %v2572 = vrot.slane %v2571, 2
    %v2573 = vadd.f32 %v2571, %v2572
    %v2574 = vrot.slane %v2573, 1
    %v2575 = vadd.f32 %v2573, %v2574
    %v2576 = vsel %vm2421, %v2546, 0.0
    %v2577 = vsel %vm2421, %v2547, 0.0
    %v2578 = vadd.f32 %v2576, %v2577
    %v2579 = vrot.slane %v2578, 4
    %v2580 = vadd.f32 %v2578, %v2579
    %v2581 = vrot.slane %v2580, 2
    %v2582 = vadd.f32 %v2580, %v2581
    %v2583 = vrot.slane %v2582, 1
    %v2584 = vadd.f32 %v2582, %v2583
    %v2585 = vsel %vm2421, %v2548, 0.0
    %v2586 = vsel %vm2421, %v2549, 0.0
    %v2587 = vadd.f32 %v2585, %v2586
    %v2588 = vrot.slane %v2587, 4
    %v2589 = vadd.f32 %v2587, %v2588
    %v2590 = vrot.slane %v2589, 2
    %v2591 = vadd.f32 %v2589, %v2590
    %v2592 = vrot.slane %v2591, 1
    %v2593 = vadd.f32 %v2591, %v2592
    %v2594 = vsel %vm2421, %v2550, 0.0
    %v2595 = vsel %vm2421, %v2551, 0.0
    %v2596 = vadd.f32 %v2594, %v2595
    %v2597 = vrot.slane %v2596, 4
    %v2598 = vadd.f32 %v2596, %v2597
    %v2599 = vrot.slane %v2598, 2
    %v2600 = vadd.f32 %v2598, %v2599
    %v2601 = vrot.slane %v2600, 1
    %v2602 = vadd.f32 %v2600, %v2601
    %v2603 = vsel %vm2421, %v2552, 0.0
    %v2604 = vsel %vm2421, %v2553, 0.0
    %v2605 = vadd.f32 %v2603, %v2604
    %v2606 = vrot.slane %v2605, 4
    %v2607 = vadd.f32 %v2605, %v2606
    %v2608 = vrot.slane %v2607, 2
    %v2609 = vadd.f32 %v2607, %v2608
    %v2610 = vrot.slane %v2609, 1
    %v2611 = vadd.f32 %v2609, %v2610
    %v2612 = vsel %vm2421, %v2554, 0.0
    %v2613 = vsel %vm2421, %v2555, 0.0
    %v2614 = vadd.f32 %v2612, %v2613
    %v2615 = vrot.slane %v2614, 4
    %v2616 = vadd.f32 %v2614, %v2615
    %v2617 = vrot.slane %v2616, 2
    %v2618 = vadd.f32 %v2616, %v2617
    %v2619 = vrot.slane %v2618, 1
    %v2620 = vadd.f32 %v2618, %v2619
    %v2621 = vsel %vm2421, %v2556, 0.0
    %v2622 = vsel %vm2421, %v2557, 0.0
    %v2623 = vadd.f32 %v2621, %v2622
    %v2624 = vrot.slane %v2623, 4
    %v2625 = vadd.f32 %v2623, %v2624
    %v2626 = vrot.slane %v2625, 2
    %v2627 = vadd.f32 %v2625, %v2626
    %v2628 = vrot.slane %v2627, 1
    %v2629 = vadd.f32 %v2627, %v2628
    %v2630 = vmax.f32 %v2566, 1e-30
    %v2631 = vmax.f32 %v2575, 1e-30
    %v2632 = vmax.f32 %v2584, 1e-30
    %v2633 = vmax.f32 %v2593, 1e-30
    %v2634 = vmax.f32 %v2602, 1e-30
    %v2635 = vmax.f32 %v2611, 1e-30
    %v2636 = vmax.f32 %v2620, 1e-30
    %v2637 = vmax.f32 %v2629, 1e-30
    %v2638 = vrcp.pop %v2630
    %v2639 = vrcp.pop %v2631
    %v2640 = vrcp.pop %v2632
    %v2641 = vrcp.pop %v2633
    %v2642 = vrcp.pop %v2634
    %v2643 = vrcp.pop %v2635
    %v2644 = vrcp.pop %v2636
    %v2645 = vrcp.pop %v2637
    %v2646 = vmul.f32 %v2542, %v2638
    %v2647 = vmul.f32 %v2543, %v2638
    %v2648 = vmul.f32 %v2544, %v2639
    %v2649 = vmul.f32 %v2545, %v2639
    %v2650 = vmul.f32 %v2546, %v2640
    %v2651 = vmul.f32 %v2547, %v2640
    %v2652 = vmul.f32 %v2548, %v2641
    %v2653 = vmul.f32 %v2549, %v2641
    %v2654 = vmul.f32 %v2550, %v2642
    %v2655 = vmul.f32 %v2551, %v2642
    %v2656 = vmul.f32 %v2552, %v2643
    %v2657 = vmul.f32 %v2553, %v2643
    %v2658 = vmul.f32 %v2554, %v2644
    %v2659 = vmul.f32 %v2555, %v2644
    %v2660 = vmul.f32 %v2556, %v2645
    %v2661 = vmul.f32 %v2557, %v2645
    %v2662 = vunpack.c.l.bf16 %v81
    %v2663 = vunpack.c.l.bf16 %v82
    %v2664 = vunpack.c.l.bf16 %v83
    %v2665 = vunpack.c.l.bf16 %v84
    %v2666 = vunpack.c.l.bf16 %v85
    %v2667 = vunpack.c.l.bf16 %v86
    %v2668 = vunpack.c.l.bf16 %v87
    %v2669 = vunpack.c.l.bf16 %v88
    %v2670 = vunpack.c.l.bf16 %v89
    %v2671 = vunpack.c.l.bf16 %v90
    %v2672 = vunpack.c.l.bf16 %v91
    %v2673 = vunpack.c.l.bf16 %v92
    %v2674 = vunpack.c.l.bf16 %v93
    %v2675 = vunpack.c.l.bf16 %v94
    %v2676 = vunpack.c.l.bf16 %v95
    %v2677 = vunpack.c.l.bf16 %v96
    %2679 = vset.pattern.permute.xlu0 0
    %2680 = vperm.xlu0 %2679, %v2646
    %v2681 = vpop.permute.xlu0 %2680
    %2684 = vset.pattern.permute.xlu0 0
    %2685 = vperm.xlu0 %2684, %v2647
    %v2686 = vpop.permute.xlu0 %2685
    %2689 = vset.pattern.permute.xlu0 0
    %2690 = vperm.xlu0 %2689, %v2648
    %v2691 = vpop.permute.xlu0 %2690
    %2694 = vset.pattern.permute.xlu0 0
    %2695 = vperm.xlu0 %2694, %v2649
    %v2696 = vpop.permute.xlu0 %2695
    %2699 = vset.pattern.permute.xlu0 0
    %2700 = vperm.xlu0 %2699, %v2650
    %v2701 = vpop.permute.xlu0 %2700
    %2704 = vset.pattern.permute.xlu0 0
    %2705 = vperm.xlu0 %2704, %v2651
    %v2706 = vpop.permute.xlu0 %2705
    %2709 = vset.pattern.permute.xlu0 0
    %2710 = vperm.xlu0 %2709, %v2652
    %v2711 = vpop.permute.xlu0 %2710
    %2714 = vset.pattern.permute.xlu0 0
    %2715 = vperm.xlu0 %2714, %v2653
    %v2716 = vpop.permute.xlu0 %2715
    %2719 = vset.pattern.permute.xlu0 0
    %2720 = vperm.xlu0 %2719, %v2654
    %v2721 = vpop.permute.xlu0 %2720
    %2724 = vset.pattern.permute.xlu0 0
    %2725 = vperm.xlu0 %2724, %v2655
    %v2726 = vpop.permute.xlu0 %2725
    %2729 = vset.pattern.permute.xlu0 0
    %2730 = vperm.xlu0 %2729, %v2656
    %v2731 = vpop.permute.xlu0 %2730
    %2734 = vset.pattern.permute.xlu0 0
    %2735 = vperm.xlu0 %2734, %v2657
    %v2736 = vpop.permute.xlu0 %2735
    %2739 = vset.pattern.permute.xlu0 0
    %2740 = vperm.xlu0 %2739, %v2658
    %v2741 = vpop.permute.xlu0 %2740
    %2744 = vset.pattern.permute.xlu0 0
    %2745 = vperm.xlu0 %2744, %v2659
    %v2746 = vpop.permute.xlu0 %2745
    %2749 = vset.pattern.permute.xlu0 0
    %2750 = vperm.xlu0 %2749, %v2660
    %v2751 = vpop.permute.xlu0 %2750
    %2754 = vset.pattern.permute.xlu0 0
    %2755 = vperm.xlu0 %2754, %v2661
    %v2756 = vpop.permute.xlu0 %2755
    %v2758 = vmul.f32 %v2681, %v2662
    %v2759 = vmul.f32 %v2686, %v2663
    %v2760 = vmul.f32 %v2691, %v2664
    %v2761 = vmul.f32 %v2696, %v2665
    %v2762 = vmul.f32 %v2701, %v2666
    %v2763 = vmul.f32 %v2706, %v2667
    %v2764 = vmul.f32 %v2711, %v2668
    %v2765 = vmul.f32 %v2716, %v2669
    %v2766 = vmul.f32 %v2721, %v2670
    %v2767 = vmul.f32 %v2726, %v2671
    %v2768 = vmul.f32 %v2731, %v2672
    %v2769 = vmul.f32 %v2736, %v2673
    %v2770 = vmul.f32 %v2741, %v2674
    %v2771 = vmul.f32 %v2746, %v2675
    %v2772 = vmul.f32 %v2751, %v2676
    %v2773 = vmul.f32 %v2756, %v2677
    %v2774 = vsel %vm185, %v2758, 0.0
    %v2775 = vsel %vm185, %v2759, 0.0
    %v2776 = vadd.f32 %v2774, %v2775
    %v2777 = vrot.slane %v2776, 4
    %v2778 = vadd.f32 %v2776, %v2777
    %v2779 = vrot.slane %v2778, 2
    %v2780 = vadd.f32 %v2778, %v2779
    %v2781 = vrot.slane %v2780, 1
    %v2782 = vadd.f32 %v2780, %v2781
    %v2783 = vsel %vm185, %v2760, 0.0
    %v2784 = vsel %vm185, %v2761, 0.0
    %v2785 = vadd.f32 %v2783, %v2784
    %v2786 = vrot.slane %v2785, 4
    %v2787 = vadd.f32 %v2785, %v2786
    %v2788 = vrot.slane %v2787, 2
    %v2789 = vadd.f32 %v2787, %v2788
    %v2790 = vrot.slane %v2789, 1
    %v2791 = vadd.f32 %v2789, %v2790
    %v2792 = vsel %vm185, %v2762, 0.0
    %v2793 = vsel %vm185, %v2763, 0.0
    %v2794 = vadd.f32 %v2792, %v2793
    %v2795 = vrot.slane %v2794, 4
    %v2796 = vadd.f32 %v2794, %v2795
    %v2797 = vrot.slane %v2796, 2
    %v2798 = vadd.f32 %v2796, %v2797
    %v2799 = vrot.slane %v2798, 1
    %v2800 = vadd.f32 %v2798, %v2799
    %v2801 = vsel %vm185, %v2764, 0.0
    %v2802 = vsel %vm185, %v2765, 0.0
    %v2803 = vadd.f32 %v2801, %v2802
    %v2804 = vrot.slane %v2803, 4
    %v2805 = vadd.f32 %v2803, %v2804
    %v2806 = vrot.slane %v2805, 2
    %v2807 = vadd.f32 %v2805, %v2806
    %v2808 = vrot.slane %v2807, 1
    %v2809 = vadd.f32 %v2807, %v2808
    %v2810 = vsel %vm185, %v2766, 0.0
    %v2811 = vsel %vm185, %v2767, 0.0
    %v2812 = vadd.f32 %v2810, %v2811
    %v2813 = vrot.slane %v2812, 4
    %v2814 = vadd.f32 %v2812, %v2813
    %v2815 = vrot.slane %v2814, 2
    %v2816 = vadd.f32 %v2814, %v2815
    %v2817 = vrot.slane %v2816, 1
    %v2818 = vadd.f32 %v2816, %v2817
    %v2819 = vsel %vm185, %v2768, 0.0
    %v2820 = vsel %vm185, %v2769, 0.0
    %v2821 = vadd.f32 %v2819, %v2820
    %v2822 = vrot.slane %v2821, 4
    %v2823 = vadd.f32 %v2821, %v2822
    %v2824 = vrot.slane %v2823, 2
    %v2825 = vadd.f32 %v2823, %v2824
    %v2826 = vrot.slane %v2825, 1
    %v2827 = vadd.f32 %v2825, %v2826
    %v2828 = vsel %vm185, %v2770, 0.0
    %v2829 = vsel %vm185, %v2771, 0.0
    %v2830 = vadd.f32 %v2828, %v2829
    %v2831 = vrot.slane %v2830, 4
    %v2832 = vadd.f32 %v2830, %v2831
    %v2833 = vrot.slane %v2832, 2
    %v2834 = vadd.f32 %v2832, %v2833
    %v2835 = vrot.slane %v2834, 1
    %v2836 = vadd.f32 %v2834, %v2835
    %v2837 = vsel %vm185, %v2772, 0.0
    %v2838 = vsel %vm185, %v2773, 0.0
    %v2839 = vadd.f32 %v2837, %v2838
    %v2840 = vrot.slane %v2839, 4
    %v2841 = vadd.f32 %v2839, %v2840
    %v2842 = vrot.slane %v2841, 2
    %v2843 = vadd.f32 %v2841, %v2842
    %v2844 = vrot.slane %v2843, 1
    %v2845 = vadd.f32 %v2843, %v2844
    %vm2854 = vcmask 1041409
    %v2855 = vsel %vm2854, %v2791, %v2782
    %vm2856 = vcmask 1042434
    %v2857 = vsel %vm2856, %v2800, %v2855
    %vm2858 = vcmask 1043459
    %v2859 = vsel %vm2858, %v2809, %v2857
    %vm2860 = vcmask 1044484
    %v2861 = vsel %vm2860, %v2818, %v2859
    %vm2862 = vcmask 1045509
    %v2863 = vsel %vm2862, %v2827, %v2861
    %vm2864 = vcmask 1046534
    %v2865 = vsel %vm2864, %v2836, %v2863
    %vm2866 = vcmask 1047559
    %v2867 = vsel %vm2866, %v2845, %v2865
    %2869 = vst.msk [vmem:[#allocation10] sm:$0xff] %vm185, %v2867
    // Predicated region
    $region46: #{tpu_custom_call.1} parent=1 // pred_check
      _
    $region47: #{tpu_custom_call.1} parent=1 // pred_check_branch
      %2871 = sbr.rel (0) target = $region49
    $region48: #{tpu_custom_call.1} parent=1 // pred_region
      %s2873 = ssub.s32 128, 128
      %2874 = vsyncadd [#allocation4], %s2873
      %s2876 = sshll.u32 [#allocation10], 4
      %s2877 = int_to_ptr.vmem [resolvable:$true] %s2876
      %2879 = dma.vmem_to_hbm [thread:$0]  %s2877, 128, %s7, [#allocation4]
    $region49: #{tpu_custom_call.1} parent=1 // pred_fallthru
      _
    // Predicated region
    $region50: #{tpu_custom_call.1} parent=1 // pred_check
      _
    $region51: #{tpu_custom_call.1} parent=1 // pred_check_branch
      %2881 = sbr.rel (0) target = $region53
    $region52: #{tpu_custom_call.1} parent=1 // pred_region
      %2882 = dma.done [#allocation4], 128
    $region53: #{tpu_custom_call.1} parent=1 // pred_fallthru
      _
    %2883 = vsyncpa [#allocation3], 1
    %2884 = vsyncpa [#allocation6], 1
    %2885 = vsyncpa [#allocation9], 1
    %2886 = vsyncpa [#allocation4], 1

</llo_original>
